<compile_context>
chip_gen: v7x
topology: tpu7x:2x2x1
jax: 0.10.0
libtpu: 0.0.40
codegen_flags: <defaults>
</compile_context>

<pallas_src>
import jax
import jax.numpy as jnp
from jax.experimental import pallas as pl
from jax.experimental.pallas import tpu as pltpu


def _round_up(v, m):
    return (v + m - 1) // m * m


# ---------------------------------------------------------------------------
# Pallas kernel: two fused GatedEquivariantBlocks on one row tile
# ---------------------------------------------------------------------------
def _gated_block(x, v_list, wvf, wu1x, wu1v, b1, wu2s, bs, wu2g, bg):
    """One GatedEquivariantBlock on a row tile.

    x      : (T, Hin_p)          scalar features
    v_list : 3 x (T, Hin_p)      vector features (one 2-D slab per spatial comp.)
    wvf    : (Hin_p, Hin_p+Out_p) fused, transposed [vec1_proj | vec2_proj]
    wu1x/wu1v : split halves of update_net[0] (so no concat([x, vec1]) copy)
    wu2s/wu2g : scalar-head / gate-head of update_net[2] (no lane slicing)
    Returns x_new (T, Out_p) f32 and v_new as 3 x (T, Out_p) f32.
    """
    T = x.shape[0]
    split = wvf.shape[0]  # = Hin_p (lane-aligned split point, multiple of 128)

    def mm(a, w):
        # bf16 (or f32) MXU inputs, f32 accumulate
        return jnp.dot(a.astype(w.dtype), w, preferred_element_type=jnp.float32)

    # --- single fused MXU pass over the 3 stacked spatial components -------------
    v_stack = jnp.concatenate(v_list, axis=0)                 # (3T, Hin_p), tile-aligned
    proj = mm(v_stack, wvf)                                   # (3T, Hin_p + Out_p) f32
    sq = jnp.square(proj[:, :split])                          # vec1_proj, squared
    vec1 = jnp.sqrt(sq[0:T] + sq[T:2 * T] + sq[2 * T:3 * T])  # ||.|| over components
    vec2 = [proj[0:T, split:], proj[T:2 * T, split:], proj[2 * T:3 * T, split:]]

    # --- update_net: cat([x, vec1]) @ W1  ==  x @ W1x + vec1 @ W1v ---------------
    h = mm(x, wu1x) + mm(vec1, wu1v) + b1
    h = h * jax.nn.sigmoid(h)                                 # SiLU (f32, VPU/EUP)
    x_head = mm(h, wu2s) + bs                                 # scalar head
    gate = mm(h, wu2g) + bg                                   # gate head (no activation)
    x_new = x_head * jax.nn.sigmoid(x_head)                   # SiLU
    v_new = [gate * v2 for v2 in vec2]                        # gate broadcast over comps
    return x_new, v_new


def equi_output_kernel(
    x_ref, vec_ref,
    wvf1_ref, wu1x1_ref, wu1v1_ref, wu2s1_ref, wu2g1_ref,
    wvf2_ref, wu1x2_ref, wu1v2_ref, wu2s2_ref, wu2g2_ref,
    b1u1_ref, b1s_ref, b1g_ref, b2u1_ref, b2s_ref, b2g_ref,
    x_out_ref, vec_out_ref,
):
    x = x_ref[...]                                   # (T, Hp)
    v = [vec_ref[0], vec_ref[1], vec_ref[2]]         # 3 x (T, Hp)

    # block 1: hidden=H  -> out=H//2   (all dims padded to multiples of 128)
    x, v = _gated_block(
        x, v, wvf1_ref[...], wu1x1_ref[...], wu1v1_ref[...], b1u1_ref[...],
        wu2s1_ref[...], b1s_ref[...], wu2g1_ref[...], b1g_ref[...])
    # block 2: hidden=H//2 -> out=1 (padded to 128; only lane 0 is real)
    x, v = _gated_block(
        x, v, wvf2_ref[...], wu1x2_ref[...], wu1v2_ref[...], b2u1_ref[...],
        wu2s2_ref[...], b2s_ref[...], wu2g2_ref[...], b2g_ref[...])

    # lane-dense 128-wide stores (padding columns are exactly zero)
    x_out_ref[...] = x
    vec_out_ref[0] = v[0]
    vec_out_ref[1] = v[1]
    vec_out_ref[2] = v[2]


# ---------------------------------------------------------------------------
# Parameter initialization (xavier-uniform weights, zero biases, like PyTorch)
# ---------------------------------------------------------------------------
def xavier_uniform(key, shape):
    fan_out, fan_in = shape
    bound = (6.0 / (fan_in + fan_out)) ** 0.5
    return jax.random.uniform(key, shape, jnp.float32, -bound, bound)


def init_params(key, hidden_channels):
    H = hidden_channels
    params = {}
    specs = {
        # block 1: hidden=H, out=H//2
        "w1_v1": (H, H),
        "w1_v2": (H // 2, H),
        "w1_u1": (H, 2 * H),
        "w1_u2": (2 * (H // 2), H),
        # block 2: hidden=H//2, out=1
        "w2_v1": (H // 2, H // 2),
        "w2_v2": (1, H // 2),
        "w2_u1": (H // 2, 2 * (H // 2)),
        "w2_u2": (2, H // 2),
    }
    keys = jax.random.split(key, len(specs))
    for k, (name, shape) in zip(keys, specs.items()):
        params[name] = xavier_uniform(k, shape)
    params["b1_u1"] = jnp.zeros((1, H), jnp.float32)
    params["b1_u2"] = jnp.zeros((1, 2 * (H // 2)), jnp.float32)
    params["b2_u1"] = jnp.zeros((1, H // 2), jnp.float32)
    params["b2_u2"] = jnp.zeros((1, 2), jnp.float32)
    return params


# ---------------------------------------------------------------------------
# One-time parameter preprocessing (hoisted out of the per-call hot path):
# transpose, split, fuse and zero-pad every weight to lane-aligned shapes.
# ---------------------------------------------------------------------------
def prepare_params(params, hidden_channels, compute_dtype=jnp.bfloat16):
    H = hidden_channels
    O1 = H // 2
    Hp = _round_up(H, 128)
    O1p = _round_up(O1, 128)
    O2p = 128  # block-2 out channels (=1) padded to a full lane width

    def pad2(a, rows, cols):
        out = jnp.zeros((rows, cols), jnp.float32)
        return out.at[: a.shape[0], : a.shape[1]].set(a.astype(jnp.float32))

    # ----- block 1 (hidden=H -> out=H//2) -----
    wvf1 = jnp.concatenate(
        [pad2(params["w1_v1"].T, Hp, Hp), pad2(params["w1_v2"].T, Hp, O1p)], axis=1)
    wu1 = params["w1_u1"]                       # (H, 2H); input order = [x, vec1]
    wu1x1 = pad2(wu1[:, :H].T, Hp, Hp)
    wu1v1 = pad2(wu1[:, H:].T, Hp, Hp)
    wu2 = params["w1_u2"]                       # (2*O1, H); rows = [x-head, gate-head]
    wu2s1 = pad2(wu2[:O1, :].T, Hp, O1p)
    wu2g1 = pad2(wu2[O1:, :].T, Hp, O1p)
    b1u1 = pad2(params["b1_u1"], 1, Hp)
    b1u2 = params["b1_u2"]
    b1s = pad2(b1u2[:, :O1], 1, O1p)
    b1g = pad2(b1u2[:, O1:], 1, O1p)

    # ----- block 2 (hidden=H//2 -> out=1) -----
    wvf2 = jnp.concatenate(
        [pad2(params["w2_v1"].T, O1p, O1p), pad2(params["w2_v2"].T, O1p, O2p)], axis=1)
    wu1b = params["w2_u1"]                      # (O1, 2*O1)
    wu1x2 = pad2(wu1b[:, :O1].T, O1p, O1p)
    wu1v2 = pad2(wu1b[:, O1:].T, O1p, O1p)
    wu2b = params["w2_u2"]                      # (2, O1)
    wu2s2 = pad2(wu2b[:1, :].T, O1p, O2p)
    wu2g2 = pad2(wu2b[1:, :].T, O1p, O2p)
    b2u1 = pad2(params["b2_u1"], 1, O1p)
    b2u2 = params["b2_u2"]
    b2s = pad2(b2u2[:, :1], 1, O2p)
    b2g = pad2(b2u2[:, 1:], 1, O2p)

    weights = tuple(w.astype(compute_dtype) for w in
                    (wvf1, wu1x1, wu1v1, wu2s1, wu2g1,
                     wvf2, wu1x2, wu1v2, wu2s2, wu2g2))
    biases = (b1u1, b1s, b1g, b2u1, b2s, b2g)   # kept f32 (tiny, added post-accumulate)
    return {"weights": weights, "biases": biases,
            "dims": (H, Hp, O1p, O2p), "compute_dtype": compute_dtype}


# ---------------------------------------------------------------------------
# Wrapper: row-tiled grid over N, lane-aligned padding, parallel semantics
# ---------------------------------------------------------------------------
def equi_output(x, vec, prepped, *, tile_n=256):
    """x: (N, H)   vec: (N, 3, H)   ->   (x_out: (N,), vec_out: (N, 3))"""
    N, H = x.shape
    H0, Hp, O1p, O2p = prepped["dims"]
    assert H == H0, "prepared params were built for a different hidden size"
    cdt = prepped["compute_dtype"]

    # Row tile: multiple of 16 (bf16 sublane packing); 256 keeps the per-tile VMEM
    # footprint small enough for v7x's 64 MiB as well as v5e/v6e.
    tile_n = max(16, min(_round_up(tile_n, 16), _round_up(N, 16)))
    Np = _round_up(N, tile_n)
    grid = (Np // tile_n,)

    # Pad activations to lane-aligned shapes; transpose vec so each spatial
    # component is a contiguous (N, H) slab (single permute, outside the kernel).
    xp = jnp.zeros((Np, Hp), cdt).at[:N, :H].set(x.astype(cdt))
    vp = jnp.zeros((3, Np, Hp), cdt).at[:, :N, :H].set(
        jnp.transpose(vec, (1, 0, 2)).astype(cdt))

    weights = prepped["weights"]
    biases = prepped["biases"]

    def const_spec(a):  # grid-invariant operand: fetched once, stays VMEM-resident
        return pl.BlockSpec(a.shape, lambda i: (0, 0))

    in_specs = (
        [pl.BlockSpec((tile_n, Hp), lambda i: (i, 0)),
         pl.BlockSpec((3, tile_n, Hp), lambda i: (0, i, 0))]
        + [const_spec(w) for w in weights]
        + [const_spec(b) for b in biases]
    )
    out_specs = (
        pl.BlockSpec((tile_n, O2p), lambda i: (i, 0)),
        pl.BlockSpec((3, tile_n, O2p), lambda i: (0, i, 0)),
    )
    out_shape = (
        jax.ShapeDtypeStruct((Np, O2p), jnp.float32),
        jax.ShapeDtypeStruct((3, Np, O2p), jnp.float32),
    )

    x_slab, vec_slab = pl.pallas_call(
        equi_output_kernel,
        grid=grid,
        in_specs=in_specs,
        out_specs=out_specs,
        out_shape=out_shape,
        compiler_params=pltpu.CompilerParams(
            dimension_semantics=("parallel",),          # 2x on v7x's dual TC
            vmem_limit_bytes=32 * 1024 * 1024,
        ),
    )(xp, vp, *weights, *biases)

    # Strip lane/row padding; .squeeze() semantics of the PyTorch module.
    x_out = x_slab[:N, 0]                               # (N,)
    vec_out = jnp.transpose(vec_slab[:, :N, 0])         # (N, 3)
    return x_out, vec_out


# ---------------------------------------------------------------------------
# Pure-JAX reference (mirrors the PyTorch forward exactly, f32)
# ---------------------------------------------------------------------------
def equi_output_ref(x, vec, params):
    def block(x, v, wv1, wv2, wu1, b1, wu2, b2, out_ch):
        vec1 = jnp.linalg.norm(jnp.einsum("nch,oh->nco", v, wv1), axis=-2)
        vec2 = jnp.einsum("nch,oh->nco", v, wv2)
        xc = jnp.concatenate([x, vec1], axis=-1)
        h = jax.nn.silu(xc @ wu1.T + b1[0])
        u = h @ wu2.T + b2[0]
        x_new, gate = u[:, :out_ch], u[:, out_ch:]
        v_new = gate[:, None, :] * vec2
        return jax.nn.silu(x_new), v_new

    H = x.shape[-1]
    x, vec = block(x, vec, params["w1_v1"], params["w1_v2"], params["w1_u1"],
                   params["b1_u1"], params["w1_u2"], params["b1_u2"], H // 2)
    x, vec = block(x, vec, params["w2_v1"], params["w2_v2"], params["w2_u1"],
                   params["b2_u1"], params["w2_u2"], params["b2_u2"], 1)
    return jnp.squeeze(x), jnp.squeeze(vec)


if __name__ == "__main__":
    N, H = 40, 32                                # nodes, hidden_channels (small test)
    key = jax.random.PRNGKey(0)
    kx, kv, kp = jax.random.split(key, 3)

    x = jax.random.normal(kx, (N, H), jnp.float32)
    vec = jax.random.normal(kv, (N, 3, H), jnp.float32)
    params = init_params(kp, H)

    x_gold, vec_gold = equi_output_ref(x, vec, params)

    # exact path: f32 matmul inputs (tile_n=16 -> 3 grid steps, exercises padding)
    prepped_f32 = prepare_params(params, H, compute_dtype=jnp.float32)
    x32, v32 = jax.block_until_ready(equi_output(x, vec, prepped_f32, tile_n=16))
    assert x32.shape == (N,) and v32.shape == (N, 3)
    assert jnp.allclose(x32, x_gold, atol=1e-4, rtol=1e-4)
    assert jnp.allclose(v32, vec_gold, atol=1e-4, rtol=1e-4)

    # fast path: bf16 matmul inputs, f32 accumulate (v6e/v7x MXU sweet spot)
    prepped_bf16 = prepare_params(params, H, compute_dtype=jnp.bfloat16)
    x16, v16 = jax.block_until_ready(equi_output(x, vec, prepped_bf16, tile_n=16))
    assert jnp.allclose(x16, x_gold, atol=5e-2, rtol=1e-1)
    assert jnp.allclose(v16, vec_gold, atol=5e-2, rtol=1e-1)

    print("KERNEL_OK")
</pallas_src>

<mosaic_0001>
module attributes {stable_mosaic.version = 11 : i64} {
  func.func @equi_output_kernel(%arg0: i32, %arg1: memref<16x128xf32, #tpu.memory_space<vmem>>, %arg2: memref<3x16x128xf32, #tpu.memory_space<vmem>>, %arg3: memref<128x256xf32, #tpu.memory_space<vmem>>, %arg4: memref<128x128xf32, #tpu.memory_space<vmem>>, %arg5: memref<128x128xf32, #tpu.memory_space<vmem>>, %arg6: memref<128x128xf32, #tpu.memory_space<vmem>>, %arg7: memref<128x128xf32, #tpu.memory_space<vmem>>, %arg8: memref<128x256xf32, #tpu.memory_space<vmem>>, %arg9: memref<128x128xf32, #tpu.memory_space<vmem>>, %arg10: memref<128x128xf32, #tpu.memory_space<vmem>>, %arg11: memref<128x128xf32, #tpu.memory_space<vmem>>, %arg12: memref<128x128xf32, #tpu.memory_space<vmem>>, %arg13: memref<1x128xf32, #tpu.memory_space<vmem>>, %arg14: memref<1x128xf32, #tpu.memory_space<vmem>>, %arg15: memref<1x128xf32, #tpu.memory_space<vmem>>, %arg16: memref<1x128xf32, #tpu.memory_space<vmem>>, %arg17: memref<1x128xf32, #tpu.memory_space<vmem>>, %arg18: memref<1x128xf32, #tpu.memory_space<vmem>>, %arg19: memref<16x128xf32, #tpu.memory_space<vmem>>, %arg20: memref<3x16x128xf32, #tpu.memory_space<vmem>>) attributes {dimension_semantics = [#tpu.dimension_semantics<parallel>], iteration_bounds = array<i64: 3>, scalar_prefetch = 0 : i64, scratch_operands = 0 : i64, tpu.core_type = #tpu.core_type<tc>, window_params = [{transform_indices = @transform_0, window_bounds = array<i64: 16, 128>}, {transform_indices = @transform_1, window_bounds = array<i64: 3, 16, 128>}, {pipeline_mode = #tpu.pipeline_mode<synchronous>, transform_indices = @transform_2, window_bounds = array<i64: 128, 256>}, {pipeline_mode = #tpu.pipeline_mode<synchronous>, transform_indices = @transform_3, window_bounds = array<i64: 128, 128>}, {pipeline_mode = #tpu.pipeline_mode<synchronous>, transform_indices = @transform_4, window_bounds = array<i64: 128, 128>}, {pipeline_mode = #tpu.pipeline_mode<synchronous>, transform_indices = @transform_5, window_bounds = array<i64: 128, 128>}, {pipeline_mode = #tpu.pipeline_mode<synchronous>, transform_indices = @transform_6, window_bounds = array<i64: 128, 128>}, {pipeline_mode = #tpu.pipeline_mode<synchronous>, transform_indices = @transform_7, window_bounds = array<i64: 128, 256>}, {pipeline_mode = #tpu.pipeline_mode<synchronous>, transform_indices = @transform_8, window_bounds = array<i64: 128, 128>}, {pipeline_mode = #tpu.pipeline_mode<synchronous>, transform_indices = @transform_9, window_bounds = array<i64: 128, 128>}, {pipeline_mode = #tpu.pipeline_mode<synchronous>, transform_indices = @transform_10, window_bounds = array<i64: 128, 128>}, {pipeline_mode = #tpu.pipeline_mode<synchronous>, transform_indices = @transform_11, window_bounds = array<i64: 128, 128>}, {pipeline_mode = #tpu.pipeline_mode<synchronous>, transform_indices = @transform_12, window_bounds = array<i64: 1, 128>}, {pipeline_mode = #tpu.pipeline_mode<synchronous>, transform_indices = @transform_13, window_bounds = array<i64: 1, 128>}, {pipeline_mode = #tpu.pipeline_mode<synchronous>, transform_indices = @transform_14, window_bounds = array<i64: 1, 128>}, {pipeline_mode = #tpu.pipeline_mode<synchronous>, transform_indices = @transform_15, window_bounds = array<i64: 1, 128>}, {pipeline_mode = #tpu.pipeline_mode<synchronous>, transform_indices = @transform_16, window_bounds = array<i64: 1, 128>}, {pipeline_mode = #tpu.pipeline_mode<synchronous>, transform_indices = @transform_17, window_bounds = array<i64: 1, 128>}, {transform_indices = @transform_18, window_bounds = array<i64: 16, 128>}, {transform_indices = @transform_19, window_bounds = array<i64: 3, 16, 128>}]} {
    %c0 = arith.constant 0 : index
    %c0_0 = arith.constant 0 : index
    %0 = vector.load %arg1[%c0, %c0_0] : memref<16x128xf32, #tpu.memory_space<vmem>>, vector<16x128xf32>
    %c0_1 = arith.constant 0 : index
    %c0_2 = arith.constant 0 : index
    %c0_3 = arith.constant 0 : index
    %1 = vector.load %arg2[%c0_1, %c0_2, %c0_3] : memref<3x16x128xf32, #tpu.memory_space<vmem>>, vector<1x16x128xf32>
    %2 = vector.shape_cast %1 : vector<1x16x128xf32> to vector<16x128xf32>
    %c1 = arith.constant 1 : index
    %c0_4 = arith.constant 0 : index
    %c0_5 = arith.constant 0 : index
    %3 = vector.load %arg2[%c1, %c0_4, %c0_5] : memref<3x16x128xf32, #tpu.memory_space<vmem>>, vector<1x16x128xf32>
    %4 = vector.shape_cast %3 : vector<1x16x128xf32> to vector<16x128xf32>
    %c2 = arith.constant 2 : index
    %c0_6 = arith.constant 0 : index
    %c0_7 = arith.constant 0 : index
    %5 = vector.load %arg2[%c2, %c0_6, %c0_7] : memref<3x16x128xf32, #tpu.memory_space<vmem>>, vector<1x16x128xf32>
    %6 = vector.shape_cast %5 : vector<1x16x128xf32> to vector<16x128xf32>
    %c0_8 = arith.constant 0 : index
    %c0_9 = arith.constant 0 : index
    %7 = vector.load %arg3[%c0_8, %c0_9] : memref<128x256xf32, #tpu.memory_space<vmem>>, vector<128x256xf32>
    %c0_10 = arith.constant 0 : index
    %c0_11 = arith.constant 0 : index
    %8 = vector.load %arg4[%c0_10, %c0_11] : memref<128x128xf32, #tpu.memory_space<vmem>>, vector<128x128xf32>
    %c0_12 = arith.constant 0 : index
    %c0_13 = arith.constant 0 : index
    %9 = vector.load %arg5[%c0_12, %c0_13] : memref<128x128xf32, #tpu.memory_space<vmem>>, vector<128x128xf32>
    %c0_14 = arith.constant 0 : index
    %c0_15 = arith.constant 0 : index
    %10 = vector.load %arg13[%c0_14, %c0_15] : memref<1x128xf32, #tpu.memory_space<vmem>>, vector<1x128xf32>
    %c0_16 = arith.constant 0 : index
    %c0_17 = arith.constant 0 : index
    %11 = vector.load %arg6[%c0_16, %c0_17] : memref<128x128xf32, #tpu.memory_space<vmem>>, vector<128x128xf32>
    %c0_18 = arith.constant 0 : index
    %c0_19 = arith.constant 0 : index
    %12 = vector.load %arg14[%c0_18, %c0_19] : memref<1x128xf32, #tpu.memory_space<vmem>>, vector<1x128xf32>
    %c0_20 = arith.constant 0 : index
    %c0_21 = arith.constant 0 : index
    %13 = vector.load %arg7[%c0_20, %c0_21] : memref<128x128xf32, #tpu.memory_space<vmem>>, vector<128x128xf32>
    %c0_22 = arith.constant 0 : index
    %c0_23 = arith.constant 0 : index
    %14 = vector.load %arg15[%c0_22, %c0_23] : memref<1x128xf32, #tpu.memory_space<vmem>>, vector<1x128xf32>
    %15 = tpu.concatenate %2, %4, %6 in 0 : vector<16x128xf32>, vector<16x128xf32>, vector<16x128xf32> -> vector<48x128xf32>
    %cst = arith.constant dense<0.000000e+00> : vector<48x256xf32>
    %16 = tpu.matmul %15, %7, %cst {dimension_numbers = #tpu.dot_dimension_numbers<[1], [0], [0], [1], [0, 0, 1, 1], [], []>} : vector<48x128xf32>, vector<128x256xf32>, vector<48x256xf32> -> vector<48x256xf32>
    %17 = vector.extract_strided_slice %16 {offsets = [0, 0], sizes = [48, 128], strides = [1, 1]} : vector<48x256xf32> to vector<48x128xf32>
    %18 = arith.mulf %17, %17 : vector<48x128xf32>
    %19 = vector.extract_strided_slice %18 {offsets = [0, 0], sizes = [16, 128], strides = [1, 1]} : vector<48x128xf32> to vector<16x128xf32>
    %20 = vector.extract_strided_slice %18 {offsets = [16, 0], sizes = [16, 128], strides = [1, 1]} : vector<48x128xf32> to vector<16x128xf32>
    %21 = arith.addf %19, %20 : vector<16x128xf32>
    %22 = vector.extract_strided_slice %18 {offsets = [32, 0], sizes = [16, 128], strides = [1, 1]} : vector<48x128xf32> to vector<16x128xf32>
    %23 = arith.addf %21, %22 : vector<16x128xf32>
    %24 = math.sqrt %23 : vector<16x128xf32>
    %25 = vector.extract_strided_slice %16 {offsets = [0, 128], sizes = [16, 128], strides = [1, 1]} : vector<48x256xf32> to vector<16x128xf32>
    %26 = vector.extract_strided_slice %16 {offsets = [16, 128], sizes = [16, 128], strides = [1, 1]} : vector<48x256xf32> to vector<16x128xf32>
    %27 = vector.extract_strided_slice %16 {offsets = [32, 128], sizes = [16, 128], strides = [1, 1]} : vector<48x256xf32> to vector<16x128xf32>
    %cst_24 = arith.constant dense<0.000000e+00> : vector<16x128xf32>
    %28 = tpu.matmul %0, %8, %cst_24 {dimension_numbers = #tpu.dot_dimension_numbers<[1], [0], [0], [1], [0, 0, 1, 1], [], []>} : vector<16x128xf32>, vector<128x128xf32>, vector<16x128xf32> -> vector<16x128xf32>
    %cst_25 = arith.constant dense<0.000000e+00> : vector<16x128xf32>
    %29 = tpu.matmul %24, %9, %cst_25 {dimension_numbers = #tpu.dot_dimension_numbers<[1], [0], [0], [1], [0, 0, 1, 1], [], []>} : vector<16x128xf32>, vector<128x128xf32>, vector<16x128xf32> -> vector<16x128xf32>
    %30 = arith.addf %28, %29 : vector<16x128xf32>
    %31 = vector.broadcast %10 : vector<1x128xf32> to vector<16x128xf32>
    %32 = arith.addf %30, %31 : vector<16x128xf32>
    %33 = arith.negf %32 : vector<16x128xf32>
    %34 = math.exp %33 : vector<16x128xf32>
    %cst_26 = arith.constant 1.000000e+00 : f32
    %35 = vector.broadcast %cst_26 : f32 to vector<16x128xf32>
    %36 = arith.addf %35, %34 : vector<16x128xf32>
    %37 = arith.divf %35, %36 : vector<16x128xf32>
    %38 = arith.mulf %32, %37 : vector<16x128xf32>
    %cst_27 = arith.constant dense<0.000000e+00> : vector<16x128xf32>
    %39 = tpu.matmul %38, %11, %cst_27 {dimension_numbers = #tpu.dot_dimension_numbers<[1], [0], [0], [1], [0, 0, 1, 1], [], []>} : vector<16x128xf32>, vector<128x128xf32>, vector<16x128xf32> -> vector<16x128xf32>
    %40 = vector.broadcast %12 : vector<1x128xf32> to vector<16x128xf32>
    %41 = arith.addf %39, %40 : vector<16x128xf32>
    %cst_28 = arith.constant dense<0.000000e+00> : vector<16x128xf32>
    %42 = tpu.matmul %38, %13, %cst_28 {dimension_numbers = #tpu.dot_dimension_numbers<[1], [0], [0], [1], [0, 0, 1, 1], [], []>} : vector<16x128xf32>, vector<128x128xf32>, vector<16x128xf32> -> vector<16x128xf32>
    %43 = vector.broadcast %14 : vector<1x128xf32> to vector<16x128xf32>
    %44 = arith.addf %42, %43 : vector<16x128xf32>
    %45 = arith.negf %41 : vector<16x128xf32>
    %46 = math.exp %45 : vector<16x128xf32>
    %cst_29 = arith.constant 1.000000e+00 : f32
    %47 = vector.broadcast %cst_29 : f32 to vector<16x128xf32>
    %48 = arith.addf %47, %46 : vector<16x128xf32>
    %49 = arith.divf %47, %48 : vector<16x128xf32>
    %50 = arith.mulf %41, %49 : vector<16x128xf32>
    %51 = arith.mulf %44, %25 : vector<16x128xf32>
    %52 = arith.mulf %44, %26 : vector<16x128xf32>
    %53 = arith.mulf %44, %27 : vector<16x128xf32>
    %c0_30 = arith.constant 0 : index
    %c0_31 = arith.constant 0 : index
    %54 = vector.load %arg8[%c0_30, %c0_31] : memref<128x256xf32, #tpu.memory_space<vmem>>, vector<128x256xf32>
    %c0_32 = arith.constant 0 : index
    %c0_33 = arith.constant 0 : index
    %55 = vector.load %arg9[%c0_32, %c0_33] : memref<128x128xf32, #tpu.memory_space<vmem>>, vector<128x128xf32>
    %c0_34 = arith.constant 0 : index
    %c0_35 = arith.constant 0 : index
    %56 = vector.load %arg10[%c0_34, %c0_35] : memref<128x128xf32, #tpu.memory_space<vmem>>, vector<128x128xf32>
    %c0_36 = arith.constant 0 : index
    %c0_37 = arith.constant 0 : index
    %57 = vector.load %arg16[%c0_36, %c0_37] : memref<1x128xf32, #tpu.memory_space<vmem>>, vector<1x128xf32>
    %c0_38 = arith.constant 0 : index
    %c0_39 = arith.constant 0 : index
    %58 = vector.load %arg11[%c0_38, %c0_39] : memref<128x128xf32, #tpu.memory_space<vmem>>, vector<128x128xf32>
    %c0_40 = arith.constant 0 : index
    %c0_41 = arith.constant 0 : index
    %59 = vector.load %arg17[%c0_40, %c0_41] : memref<1x128xf32, #tpu.memory_space<vmem>>, vector<1x128xf32>
    %c0_42 = arith.constant 0 : index
    %c0_43 = arith.constant 0 : index
    %60 = vector.load %arg12[%c0_42, %c0_43] : memref<128x128xf32, #tpu.memory_space<vmem>>, vector<128x128xf32>
    %c0_44 = arith.constant 0 : index
    %c0_45 = arith.constant 0 : index
    %61 = vector.load %arg18[%c0_44, %c0_45] : memref<1x128xf32, #tpu.memory_space<vmem>>, vector<1x128xf32>
    %62 = tpu.concatenate %51, %52, %53 in 0 : vector<16x128xf32>, vector<16x128xf32>, vector<16x128xf32> -> vector<48x128xf32>
    %cst_46 = arith.constant dense<0.000000e+00> : vector<48x256xf32>
    %63 = tpu.matmul %62, %54, %cst_46 {dimension_numbers = #tpu.dot_dimension_numbers<[1], [0], [0], [1], [0, 0, 1, 1], [], []>} : vector<48x128xf32>, vector<128x256xf32>, vector<48x256xf32> -> vector<48x256xf32>
    %64 = vector.extract_strided_slice %63 {offsets = [0, 0], sizes = [48, 128], strides = [1, 1]} : vector<48x256xf32> to vector<48x128xf32>
    %65 = arith.mulf %64, %64 : vector<48x128xf32>
    %66 = vector.extract_strided_slice %65 {offsets = [0, 0], sizes = [16, 128], strides = [1, 1]} : vector<48x128xf32> to vector<16x128xf32>
    %67 = vector.extract_strided_slice %65 {offsets = [16, 0], sizes = [16, 128], strides = [1, 1]} : vector<48x128xf32> to vector<16x128xf32>
    %68 = arith.addf %66, %67 : vector<16x128xf32>
    %69 = vector.extract_strided_slice %65 {offsets = [32, 0], sizes = [16, 128], strides = [1, 1]} : vector<48x128xf32> to vector<16x128xf32>
    %70 = arith.addf %68, %69 : vector<16x128xf32>
    %71 = math.sqrt %70 : vector<16x128xf32>
    %72 = vector.extract_strided_slice %63 {offsets = [0, 128], sizes = [16, 128], strides = [1, 1]} : vector<48x256xf32> to vector<16x128xf32>
    %73 = vector.extract_strided_slice %63 {offsets = [16, 128], sizes = [16, 128], strides = [1, 1]} : vector<48x256xf32> to vector<16x128xf32>
    %74 = vector.extract_strided_slice %63 {offsets = [32, 128], sizes = [16, 128], strides = [1, 1]} : vector<48x256xf32> to vector<16x128xf32>
    %cst_47 = arith.constant dense<0.000000e+00> : vector<16x128xf32>
    %75 = tpu.matmul %50, %55, %cst_47 {dimension_numbers = #tpu.dot_dimension_numbers<[1], [0], [0], [1], [0, 0, 1, 1], [], []>} : vector<16x128xf32>, vector<128x128xf32>, vector<16x128xf32> -> vector<16x128xf32>
    %cst_48 = arith.constant dense<0.000000e+00> : vector<16x128xf32>
    %76 = tpu.matmul %71, %56, %cst_48 {dimension_numbers = #tpu.dot_dimension_numbers<[1], [0], [0], [1], [0, 0, 1, 1], [], []>} : vector<16x128xf32>, vector<128x128xf32>, vector<16x128xf32> -> vector<16x128xf32>
    %77 = arith.addf %75, %76 : vector<16x128xf32>
    %78 = vector.broadcast %57 : vector<1x128xf32> to vector<16x128xf32>
    %79 = arith.addf %77, %78 : vector<16x128xf32>
    %80 = arith.negf %79 : vector<16x128xf32>
    %81 = math.exp %80 : vector<16x128xf32>
    %cst_49 = arith.constant 1.000000e+00 : f32
    %82 = vector.broadcast %cst_49 : f32 to vector<16x128xf32>
    %83 = arith.addf %82, %81 : vector<16x128xf32>
    %84 = arith.divf %82, %83 : vector<16x128xf32>
    %85 = arith.mulf %79, %84 : vector<16x128xf32>
    %cst_50 = arith.constant dense<0.000000e+00> : vector<16x128xf32>
    %86 = tpu.matmul %85, %58, %cst_50 {dimension_numbers = #tpu.dot_dimension_numbers<[1], [0], [0], [1], [0, 0, 1, 1], [], []>} : vector<16x128xf32>, vector<128x128xf32>, vector<16x128xf32> -> vector<16x128xf32>
    %87 = vector.broadcast %59 : vector<1x128xf32> to vector<16x128xf32>
    %88 = arith.addf %86, %87 : vector<16x128xf32>
    %cst_51 = arith.constant dense<0.000000e+00> : vector<16x128xf32>
    %89 = tpu.matmul %85, %60, %cst_51 {dimension_numbers = #tpu.dot_dimension_numbers<[1], [0], [0], [1], [0, 0, 1, 1], [], []>} : vector<16x128xf32>, vector<128x128xf32>, vector<16x128xf32> -> vector<16x128xf32>
    %90 = vector.broadcast %61 : vector<1x128xf32> to vector<16x128xf32>
    %91 = arith.addf %89, %90 : vector<16x128xf32>
    %92 = arith.negf %88 : vector<16x128xf32>
    %93 = math.exp %92 : vector<16x128xf32>
    %cst_52 = arith.constant 1.000000e+00 : f32
    %94 = vector.broadcast %cst_52 : f32 to vector<16x128xf32>
    %95 = arith.addf %94, %93 : vector<16x128xf32>
    %96 = arith.divf %94, %95 : vector<16x128xf32>
    %97 = arith.mulf %88, %96 : vector<16x128xf32>
    %98 = arith.mulf %91, %72 : vector<16x128xf32>
    %99 = arith.mulf %91, %73 : vector<16x128xf32>
    %100 = arith.mulf %91, %74 : vector<16x128xf32>
    %c0_53 = arith.constant 0 : index
    %c0_54 = arith.constant 0 : index
    %101 = vector.load %arg19[%c0_53, %c0_54] : memref<16x128xf32, #tpu.memory_space<vmem>>, vector<16x128xf32>
    tpu.vector_store %arg19[%c0_53, %c0_54], %97 {strides = array<i32>} : memref<16x128xf32, #tpu.memory_space<vmem>>, vector<16x128xf32>,
    %c0_55 = arith.constant 0 : index
    %c0_56 = arith.constant 0 : index
    %c0_57 = arith.constant 0 : index
    %102 = vector.load %arg20[%c0_55, %c0_56, %c0_57] : memref<3x16x128xf32, #tpu.memory_space<vmem>>, vector<1x16x128xf32>
    %103 = vector.shape_cast %102 : vector<1x16x128xf32> to vector<16x128xf32>
    %104 = vector.shape_cast %98 : vector<16x128xf32> to vector<1x16x128xf32>
    tpu.vector_store %arg20[%c0_55, %c0_56, %c0_57], %104 {strides = array<i32>} : memref<3x16x128xf32, #tpu.memory_space<vmem>>, vector<1x16x128xf32>,
    %c1_58 = arith.constant 1 : index
    %c0_59 = arith.constant 0 : index
    %c0_60 = arith.constant 0 : index
    %105 = vector.load %arg20[%c1_58, %c0_59, %c0_60] : memref<3x16x128xf32, #tpu.memory_space<vmem>>, vector<1x16x128xf32>
    %106 = vector.shape_cast %105 : vector<1x16x128xf32> to vector<16x128xf32>
    %107 = vector.shape_cast %99 : vector<16x128xf32> to vector<1x16x128xf32>
    tpu.vector_store %arg20[%c1_58, %c0_59, %c0_60], %107 {strides = array<i32>} : memref<3x16x128xf32, #tpu.memory_space<vmem>>, vector<1x16x128xf32>,
    %c2_61 = arith.constant 2 : index
    %c0_62 = arith.constant 0 : index
    %c0_63 = arith.constant 0 : index
    %108 = vector.load %arg20[%c2_61, %c0_62, %c0_63] : memref<3x16x128xf32, #tpu.memory_space<vmem>>, vector<1x16x128xf32>
    %109 = vector.shape_cast %108 : vector<1x16x128xf32> to vector<16x128xf32>
    %110 = vector.shape_cast %100 : vector<16x128xf32> to vector<1x16x128xf32>
    tpu.vector_store %arg20[%c2_61, %c0_62, %c0_63], %110 {strides = array<i32>} : memref<3x16x128xf32, #tpu.memory_space<vmem>>, vector<1x16x128xf32>,
    return
  }
  func.func @transform_0(%arg0: i32) -> (i32, i32) {
    %c0_i32 = arith.constant 0 : i32
    %c0_i32_0 = arith.constant 0 : i32
    return %arg0, %c0_i32 : i32, i32
  }
  func.func @transform_1(%arg0: i32) -> (i32, i32, i32) {
    %c0_i32 = arith.constant 0 : i32
    %c0_i32_0 = arith.constant 0 : i32
    %c0_i32_1 = arith.constant 0 : i32
    return %c0_i32, %arg0, %c0_i32_0 : i32, i32, i32
  }
  func.func @transform_2(%arg0: i32) -> (i32, i32) {
    %c0_i32 = arith.constant 0 : i32
    %c0_i32_0 = arith.constant 0 : i32
    %c0_i32_1 = arith.constant 0 : i32
    return %c0_i32, %c0_i32_0 : i32, i32
  }
  func.func @transform_3(%arg0: i32) -> (i32, i32) {
    %c0_i32 = arith.constant 0 : i32
    %c0_i32_0 = arith.constant 0 : i32
    %c0_i32_1 = arith.constant 0 : i32
    return %c0_i32, %c0_i32_0 : i32, i32
  }
  func.func @transform_4(%arg0: i32) -> (i32, i32) {
    %c0_i32 = arith.constant 0 : i32
    %c0_i32_0 = arith.constant 0 : i32
    %c0_i32_1 = arith.constant 0 : i32
    return %c0_i32, %c0_i32_0 : i32, i32
  }
  func.func @transform_5(%arg0: i32) -> (i32, i32) {
    %c0_i32 = arith.constant 0 : i32
    %c0_i32_0 = arith.constant 0 : i32
    %c0_i32_1 = arith.constant 0 : i32
    return %c0_i32, %c0_i32_0 : i32, i32
  }
  func.func @transform_6(%arg0: i32) -> (i32, i32) {
    %c0_i32 = arith.constant 0 : i32
    %c0_i32_0 = arith.constant 0 : i32
    %c0_i32_1 = arith.constant 0 : i32
    return %c0_i32, %c0_i32_0 : i32, i32
  }
  func.func @transform_7(%arg0: i32) -> (i32, i32) {
    %c0_i32 = arith.constant 0 : i32
    %c0_i32_0 = arith.constant 0 : i32
    %c0_i32_1 = arith.constant 0 : i32
    return %c0_i32, %c0_i32_0 : i32, i32
  }
  func.func @transform_8(%arg0: i32) -> (i32, i32) {
    %c0_i32 = arith.constant 0 : i32
    %c0_i32_0 = arith.constant 0 : i32
    %c0_i32_1 = arith.constant 0 : i32
    return %c0_i32, %c0_i32_0 : i32, i32
  }
  func.func @transform_9(%arg0: i32) -> (i32, i32) {
    %c0_i32 = arith.constant 0 : i32
    %c0_i32_0 = arith.constant 0 : i32
    %c0_i32_1 = arith.constant 0 : i32
    return %c0_i32, %c0_i32_0 : i32, i32
  }
  func.func @transform_10(%arg0: i32) -> (i32, i32) {
    %c0_i32 = arith.constant 0 : i32
    %c0_i32_0 = arith.constant 0 : i32
    %c0_i32_1 = arith.constant 0 : i32
    return %c0_i32, %c0_i32_0 : i32, i32
  }
  func.func @transform_11(%arg0: i32) -> (i32, i32) {
    %c0_i32 = arith.constant 0 : i32
    %c0_i32_0 = arith.constant 0 : i32
    %c0_i32_1 = arith.constant 0 : i32
    return %c0_i32, %c0_i32_0 : i32, i32
  }
  func.func @transform_12(%arg0: i32) -> (i32, i32) {
    %c0_i32 = arith.constant 0 : i32
    %c0_i32_0 = arith.constant 0 : i32
    %c0_i32_1 = arith.constant 0 : i32
    return %c0_i32, %c0_i32_0 : i32, i32
  }
  func.func @transform_13(%arg0: i32) -> (i32, i32) {
    %c0_i32 = arith.constant 0 : i32
    %c0_i32_0 = arith.constant 0 : i32
    %c0_i32_1 = arith.constant 0 : i32
    return %c0_i32, %c0_i32_0 : i32, i32
  }
  func.func @transform_14(%arg0: i32) -> (i32, i32) {
    %c0_i32 = arith.constant 0 : i32
    %c0_i32_0 = arith.constant 0 : i32
    %c0_i32_1 = arith.constant 0 : i32
    return %c0_i32, %c0_i32_0 : i32, i32
  }
  func.func @transform_15(%arg0: i32) -> (i32, i32) {
    %c0_i32 = arith.constant 0 : i32
    %c0_i32_0 = arith.constant 0 : i32
    %c0_i32_1 = arith.constant 0 : i32
    return %c0_i32, %c0_i32_0 : i32, i32
  }
  func.func @transform_16(%arg0: i32) -> (i32, i32) {
    %c0_i32 = arith.constant 0 : i32
    %c0_i32_0 = arith.constant 0 : i32
    %c0_i32_1 = arith.constant 0 : i32
    return %c0_i32, %c0_i32_0 : i32, i32
  }
  func.func @transform_17(%arg0: i32) -> (i32, i32) {
    %c0_i32 = arith.constant 0 : i32
    %c0_i32_0 = arith.constant 0 : i32
    %c0_i32_1 = arith.constant 0 : i32
    return %c0_i32, %c0_i32_0 : i32, i32
  }
  func.func @transform_18(%arg0: i32) -> (i32, i32) {
    %c0_i32 = arith.constant 0 : i32
    %c0_i32_0 = arith.constant 0 : i32
    return %arg0, %c0_i32 : i32, i32
  }
  func.func @transform_19(%arg0: i32) -> (i32, i32, i32) {
    %c0_i32 = arith.constant 0 : i32
    %c0_i32_0 = arith.constant 0 : i32
    %c0_i32_1 = arith.constant 0 : i32
    return %c0_i32, %arg0, %c0_i32_0 : i32, i32, i32
  }
}

</mosaic_0001>

<llo_original>
// kernel: tpu_custom_call.1
$region0: #{tpu_custom_call.1}
  #allocation0 [shape = 'u32[]', space=smem, size = 0x4, offset = 0x4, fixed_abs, tag = 'smem constant byte address 0x4 - core index']
  #allocation1 [shape = 'u32[144,128]{1,0:T(1,128)}', space=vmem, size = 0x12000, scoped, tag = 'internal scratch']
  #allocation25 [shape = 's32[]', space=sflag, size = 0x4, offset = 0, fixed_abs, tag = 'sflag constant byte address 0x0 - dummy sync flag']
  #allocation27 [shape = 's32[]', space=sflag, size = 0x4, offset = 0, fixed_abs, tag = 'sflag constant byte address 0x0 - dummy sync flag']
  %s0 = inlined_call_operand.hbm [shape: f32[48,128], index: 0, kind: input, shape index: {}]
  %s1 = inlined_call_operand.hbm [shape: f32[3,48,128], index: 1, kind: input, shape index: {}]
  %s2 = inlined_call_operand.hbm [shape: f32[128,256], index: 2, kind: input, shape index: {}]
  %s3 = inlined_call_operand.hbm [shape: f32[128,128], index: 3, kind: input, shape index: {}]
  %s4 = inlined_call_operand.hbm [shape: f32[128,128], index: 4, kind: input, shape index: {}]
  %s5 = inlined_call_operand.hbm [shape: f32[128,128], index: 5, kind: input, shape index: {}]
  %s6 = inlined_call_operand.hbm [shape: f32[128,128], index: 6, kind: input, shape index: {}]
  %s7 = inlined_call_operand.hbm [shape: f32[128,256], index: 7, kind: input, shape index: {}]
  %s8 = inlined_call_operand.hbm [shape: f32[128,128], index: 8, kind: input, shape index: {}]
  %s9 = inlined_call_operand.hbm [shape: f32[128,128], index: 9, kind: input, shape index: {}]
  %s10 = inlined_call_operand.hbm [shape: f32[128,128], index: 10, kind: input, shape index: {}]
  %s11 = inlined_call_operand.hbm [shape: f32[128,128], index: 11, kind: input, shape index: {}]
  %s12 = inlined_call_operand.vmem [shape: f32[1,128], index: 12, kind: input, shape index: {}]
  %s13 = inlined_call_operand.vmem [shape: f32[1,128], index: 13, kind: input, shape index: {}]
  %s14 = inlined_call_operand.vmem [shape: f32[1,128], index: 14, kind: input, shape index: {}]
  %s15 = inlined_call_operand.vmem [shape: f32[1,128], index: 15, kind: input, shape index: {}]
  %s16 = inlined_call_operand.vmem [shape: f32[1,128], index: 16, kind: input, shape index: {}]
  %s17 = inlined_call_operand.vmem [shape: f32[1,128], index: 17, kind: input, shape index: {}]
  %s18 = inlined_call_operand.hbm [shape: f32[48,128], index: 18, kind: output, shape index: {0}]
  %s19 = inlined_call_operand.hbm [shape: f32[3,48,128], index: 19, kind: output, shape index: {1}]
  %20 = xla_tuple %s18, %s19
  %s21 = sld [smem:[#allocation0]]
  $region161: #{tpu_custom_call.1} parent=0
    _
  %s23 = ssub.s32 1, %s21
  %s24 = scalar_select 0, %s23, %s21
  $region1: #{tpu_custom_call.1} parent=0
    #allocation2 [shape = 'u8[16384]{0}', space=vmem, size = 0x4000, scoped, tag = 'input window, operand 0']
    #allocation3 [shape = 's32[2]{0}', space=sflag, size = 0x8, scoped, tag = 'scoped memory for tpu_custom_call.1']
    #allocation4 [shape = 's32[2]{0}', space=sflag, size = 0x8, scoped, tag = 'scoped memory for tpu_custom_call.1']
    #allocation5 [shape = 'u8[49152]{0}', space=vmem, size = 0xc000, scoped, tag = 'input window, operand 1']
    #allocation6 [shape = 's32[2]{0}', space=sflag, size = 0x8, scoped, tag = 'scoped memory for tpu_custom_call.1']
    #allocation7 [shape = 'u8[131072]{0}', space=vmem, size = 0x20000, scoped, tag = 'input window, operand 2, single buffered']
    #allocation8 [shape = 'u8[65536]{0}', space=vmem, size = 0x10000, scoped, tag = 'input window, operand 3, single buffered']
    #allocation9 [shape = 's32[1]{0}', space=sflag, size = 0x4, scoped, tag = 'scoped memory for tpu_custom_call.1']
    #allocation10 [shape = 'u8[65536]{0}', space=vmem, size = 0x10000, scoped, tag = 'input window, operand 4, single buffered']
    #allocation11 [shape = 'u8[65536]{0}', space=vmem, size = 0x10000, scoped, tag = 'input window, operand 5, single buffered']
    #allocation12 [shape = 's32[1]{0}', space=sflag, size = 0x4, scoped, tag = 'scoped memory for tpu_custom_call.1']
    #allocation13 [shape = 'u8[65536]{0}', space=vmem, size = 0x10000, scoped, tag = 'input window, operand 6, single buffered']
    #allocation14 [shape = 'u8[131072]{0}', space=vmem, size = 0x20000, scoped, tag = 'input window, operand 7, single buffered']
    #allocation15 [shape = 's32[1]{0}', space=sflag, size = 0x4, scoped, tag = 'scoped memory for tpu_custom_call.1']
    #allocation16 [shape = 'u8[65536]{0}', space=vmem, size = 0x10000, scoped, tag = 'input window, operand 8, single buffered']
    #allocation17 [shape = 'u8[65536]{0}', space=vmem, size = 0x10000, scoped, tag = 'input window, operand 9, single buffered']
    #allocation18 [shape = 's32[1]{0}', space=sflag, size = 0x4, scoped, tag = 'scoped memory for tpu_custom_call.1']
    #allocation19 [shape = 'u8[65536]{0}', space=vmem, size = 0x10000, scoped, tag = 'input window, operand 10, single buffered']
    #allocation20 [shape = 'u8[65536]{0}', space=vmem, size = 0x10000, scoped, tag = 'input window, operand 11, single buffered']
    #allocation21 [shape = 's32[1]{0}', space=sflag, size = 0x4, scoped, tag = 'scoped memory for tpu_custom_call.1']
    #allocation22 [shape = 'u8[16384]{0}', space=vmem, size = 0x4000, scoped, tag = 'output window, operand 0']
    #allocation23 [shape = 'u8[49152]{0}', space=vmem, size = 0xc000, scoped, tag = 'output window, operand 1']
    #allocation24 [shape = 's32[2]{0}', space=sflag, size = 0x8, scoped, tag = 'scoped memory for tpu_custom_call.1']
    %25 = vsyncpa [#allocation3], 0
    %s26 = scalar_lea.sflag [#allocation3], 1
    %27 = vsyncpa %s26, 0
    %28 = vsyncpa [#allocation6], 0
    %s29 = scalar_lea.sflag [#allocation6], 1
    %30 = vsyncpa %s29, 0
    %31 = vsyncpa [#allocation9], 0
    %32 = vsyncpa [#allocation12], 0
    %33 = vsyncpa [#allocation15], 0
    %34 = vsyncpa [#allocation18], 0
    %35 = vsyncpa [#allocation21], 0
    %36 = vsyncpa [#allocation4], 0
    %s37 = scalar_lea.sflag [#allocation4], 1
    %38 = vsyncpa %s37, 0
    %39 = vsyncpa [#allocation24], 0
    %s40 = scalar_lea.sflag [#allocation24], 1
    %41 = vsyncpa %s40, 0
    loop: start=0, step=1, limit=5
    $region2: #{tpu_custom_call.1} parent=1 // loop_pre_header
      _
    $region3: #{tpu_custom_call.1} parent=1 // loop_header
      %s43 = sphi 0, %s47
      %p44 = scmp.ge.s32.totalorder %s43, 5
      %s53 = sphi 0, %s55
      %s56 = sphi 0, %s53
      %s57 = sphi 0, %s56
      %s73 = sphi 0, %s57
      %s79 = sphi 0, %s81
      %s82 = sphi 0, %s79
      %s83 = sphi 0, %s82
      %s99 = sphi 0, %s83
      %s103 = sphi 0, %s103
      %s105 = sphi 0, %s103
      %s106 = sphi 0, %s105
      %s120 = sphi 0, %s106
      %s124 = sphi 0, %s124
      %s126 = sphi 0, %s124
      %s127 = sphi 0, %s126
      %s141 = sphi 0, %s127
      %s145 = sphi 0, %s145
      %s147 = sphi 0, %s145
      %s148 = sphi 0, %s147
      %s162 = sphi 0, %s148
      %s166 = sphi 0, %s166
      %s168 = sphi 0, %s166
      %s169 = sphi 0, %s168
      %s183 = sphi 0, %s169
      %s187 = sphi 0, %s187
      %s189 = sphi 0, %s187
      %s190 = sphi 0, %s189
      %s204 = sphi 0, %s190
      %s208 = sphi 0, %s208
      %s210 = sphi 0, %s208
      %s211 = sphi 0, %s210
      %s225 = sphi 0, %s211
      %s229 = sphi 0, %s229
      %s231 = sphi 0, %s229
      %s232 = sphi 0, %s231
      %s246 = sphi 0, %s232
      %s250 = sphi 0, %s250
      %s252 = sphi 0, %s250
      %s253 = sphi 0, %s252
      %s267 = sphi 0, %s253
      %s271 = sphi 0, %s271
      %s273 = sphi 0, %s271
      %s274 = sphi 0, %s273
      %s288 = sphi 0, %s274
      %s292 = sphi 0, %s292
      %s294 = sphi 0, %s292
      %s295 = sphi 0, %s294
      %s309 = sphi 0, %s295
      %s313 = sphi 0, %s313
      %s315 = sphi 0, %s313
      %s316 = sphi 0, %s315
      %s330 = sphi 0, %s316
      %s334 = sphi 0, %s334
      %s336 = sphi 0, %s334
      %s337 = sphi 0, %s336
      %s351 = sphi 0, %s337
      %s355 = sphi 0, %s355
      %s357 = sphi 0, %s355
      %s358 = sphi 0, %s357
      %s372 = sphi 0, %s358
      %s376 = sphi 0, %s376
      %s378 = sphi 0, %s376
      %s379 = sphi 0, %s378
      %s393 = sphi 0, %s379
      %s397 = sphi 0, %s397
      %s399 = sphi 0, %s397
      %s400 = sphi 0, %s399
      %s414 = sphi 0, %s400
      %s418 = sphi 0, %s418
      %s420 = sphi 0, %s418
      %s421 = sphi 0, %s420
      %s435 = sphi 0, %s421
      %s441 = sphi 0, %s443
      %s444 = sphi 0, %s441
      %s445 = sphi 0, %s444
      %s461 = sphi 0, %s445
      %s467 = sphi 0, %s469
      %s470 = sphi 0, %s467
      %s471 = sphi 0, %s470
      %s487 = sphi 0, %s471
    $region4: #{tpu_custom_call.1} parent=1 // loop_header_branch
      %46 = sbr.rel (%p44) target = $region8
    $region5: #{tpu_custom_call.1} parent=1 // loop_body
      %s48 = ssub.s32 %s43, 1
      %s49 = ssub.s32 %s43, 2
      %s50 = sadd.s32 %s43, 1
      %s51 = ssub.s32 %s43, %s50
      %p52 = scmp.eq.s32.totalorder %s51, 0
      %s54 = sadd.s32 %s53, 1
      %s55 = scalar_select %p52, %s53, %s54
      %p58 = pneg %p52
      %p59 = scmp.eq.s32.totalorder %s43, 2
      %p60 = por %p58, %p59
      %p61 = scmp.ne.s32.totalorder %s53, %s56
      %p62 = scmp.eq.s32.totalorder %s43, 0
      %p63 = por %p61, %p62
      %p64 = scmp.ne.s32.totalorder %s53, %s56
      %p65 = scmp.eq.s32.totalorder %s48, 2
      %p66 = por %p64, %p65
      %p67 = scmp.ne.s32.totalorder %s56, %s57
      %p68 = scmp.eq.s32.totalorder %s48, 0
      %p69 = por %p67, %p68
      %p70 = scmp.ne.s32.totalorder %s56, %s57
      %p71 = scmp.eq.s32.totalorder %s49, 2
      %p72 = por %p70, %p71
      %p74 = scmp.ne.s32.totalorder %s57, %s73
      %p75 = scmp.eq.s32.totalorder %s49, 0
      %p76 = por %p74, %p75
      %s77 = ssub.s32 %s43, %s50
      %p78 = scmp.eq.s32.totalorder %s77, 0
      %s80 = sadd.s32 %s79, 1
      %s81 = scalar_select %p78, %s79, %s80
      %p84 = pneg %p78
      %p85 = scmp.eq.s32.totalorder %s43, 2
      %p86 = por %p84, %p85
      %p87 = scmp.ne.s32.totalorder %s79, %s82
      %p88 = scmp.eq.s32.totalorder %s43, 0
      %p89 = por %p87, %p88
      %p90 = scmp.ne.s32.totalorder %s79, %s82
      %p91 = scmp.eq.s32.totalorder %s48, 2
      %p92 = por %p90, %p91
      %p93 = scmp.ne.s32.totalorder %s82, %s83
      %p94 = scmp.eq.s32.totalorder %s48, 0
      %p95 = por %p93, %p94
      %p96 = scmp.ne.s32.totalorder %s82, %s83
      %p97 = scmp.eq.s32.totalorder %s49, 2
      %p98 = por %p96, %p97
      %p100 = scmp.ne.s32.totalorder %s83, %s99
      %p101 = scmp.eq.s32.totalorder %s49, 0
      %p102 = por %p100, %p101
      %s104 = sadd.s32 %s103, 1
      %p107 = scmp.eq.s32.totalorder %s43, 2
      %p108 = scmp.ne.s32.totalorder %s103, %s105
      %p109 = scmp.eq.s32.totalorder %s43, 0
      %p110 = por %p108, %p109
      %p111 = scmp.ne.s32.totalorder %s103, %s105
      %p112 = scmp.eq.s32.totalorder %s48, 2
      %p113 = por %p111, %p112
      %p114 = scmp.ne.s32.totalorder %s105, %s106
      %p115 = scmp.eq.s32.totalorder %s48, 0
      %p116 = por %p114, %p115
      %p117 = scmp.ne.s32.totalorder %s105, %s106
      %p118 = scmp.eq.s32.totalorder %s49, 2
      %p119 = por %p117, %p118
      %p121 = scmp.ne.s32.totalorder %s106, %s120
      %p122 = scmp.eq.s32.totalorder %s49, 0
      %p123 = por %p121, %p122
      %s125 = sadd.s32 %s124, 1
      %p128 = scmp.eq.s32.totalorder %s43, 2
      %p129 = scmp.ne.s32.totalorder %s124, %s126
      %p130 = scmp.eq.s32.totalorder %s43, 0
      %p131 = por %p129, %p130
      %p132 = scmp.ne.s32.totalorder %s124, %s126
      %p133 = scmp.eq.s32.totalorder %s48, 2
      %p134 = por %p132, %p133
      %p135 = scmp.ne.s32.totalorder %s126, %s127
      %p136 = scmp.eq.s32.totalorder %s48, 0
      %p137 = por %p135, %p136
      %p138 = scmp.ne.s32.totalorder %s126, %s127
      %p139 = scmp.eq.s32.totalorder %s49, 2
      %p140 = por %p138, %p139
      %p142 = scmp.ne.s32.totalorder %s127, %s141
      %p143 = scmp.eq.s32.totalorder %s49, 0
      %p144 = por %p142, %p143
      %s146 = sadd.s32 %s145, 1
      %p149 = scmp.eq.s32.totalorder %s43, 2
      %p150 = scmp.ne.s32.totalorder %s145, %s147
      %p151 = scmp.eq.s32.totalorder %s43, 0
      %p152 = por %p150, %p151
      %p153 = scmp.ne.s32.totalorder %s145, %s147
      %p154 = scmp.eq.s32.totalorder %s48, 2
      %p155 = por %p153, %p154
      %p156 = scmp.ne.s32.totalorder %s147, %s148
      %p157 = scmp.eq.s32.totalorder %s48, 0
      %p158 = por %p156, %p157
      %p159 = scmp.ne.s32.totalorder %s147, %s148
      %p160 = scmp.eq.s32.totalorder %s49, 2
      %p161 = por %p159, %p160
      %p163 = scmp.ne.s32.totalorder %s148, %s162
      %p164 = scmp.eq.s32.totalorder %s49, 0
      %p165 = por %p163, %p164
      %s167 = sadd.s32 %s166, 1
      %p170 = scmp.eq.s32.totalorder %s43, 2
      %p171 = scmp.ne.s32.totalorder %s166, %s168
      %p172 = scmp.eq.s32.totalorder %s43, 0
      %p173 = por %p171, %p172
      %p174 = scmp.ne.s32.totalorder %s166, %s168
      %p175 = scmp.eq.s32.totalorder %s48, 2
      %p176 = por %p174, %p175
      %p177 = scmp.ne.s32.totalorder %s168, %s169
      %p178 = scmp.eq.s32.totalorder %s48, 0
      %p179 = por %p177, %p178
      %p180 = scmp.ne.s32.totalorder %s168, %s169
      %p181 = scmp.eq.s32.totalorder %s49, 2
      %p182 = por %p180, %p181
      %p184 = scmp.ne.s32.totalorder %s169, %s183
      %p185 = scmp.eq.s32.totalorder %s49, 0
      %p186 = por %p184, %p185
      %s188 = sadd.s32 %s187, 1
      %p191 = scmp.eq.s32.totalorder %s43, 2
      %p192 = scmp.ne.s32.totalorder %s187, %s189
      %p193 = scmp.eq.s32.totalorder %s43, 0
      %p194 = por %p192, %p193
      %p195 = scmp.ne.s32.totalorder %s187, %s189
      %p196 = scmp.eq.s32.totalorder %s48, 2
      %p197 = por %p195, %p196
      %p198 = scmp.ne.s32.totalorder %s189, %s190
      %p199 = scmp.eq.s32.totalorder %s48, 0
      %p200 = por %p198, %p199
      %p201 = scmp.ne.s32.totalorder %s189, %s190
      %p202 = scmp.eq.s32.totalorder %s49, 2
      %p203 = por %p201, %p202
      %p205 = scmp.ne.s32.totalorder %s190, %s204
      %p206 = scmp.eq.s32.totalorder %s49, 0
      %p207 = por %p205, %p206
      %s209 = sadd.s32 %s208, 1
      %p212 = scmp.eq.s32.totalorder %s43, 2
      %p213 = scmp.ne.s32.totalorder %s208, %s210
      %p214 = scmp.eq.s32.totalorder %s43, 0
      %p215 = por %p213, %p214
      %p216 = scmp.ne.s32.totalorder %s208, %s210
      %p217 = scmp.eq.s32.totalorder %s48, 2
      %p218 = por %p216, %p217
      %p219 = scmp.ne.s32.totalorder %s210, %s211
      %p220 = scmp.eq.s32.totalorder %s48, 0
      %p221 = por %p219, %p220
      %p222 = scmp.ne.s32.totalorder %s210, %s211
      %p223 = scmp.eq.s32.totalorder %s49, 2
      %p224 = por %p222, %p223
      %p226 = scmp.ne.s32.totalorder %s211, %s225
      %p227 = scmp.eq.s32.totalorder %s49, 0
      %p228 = por %p226, %p227
      %s230 = sadd.s32 %s229, 1
      %p233 = scmp.eq.s32.totalorder %s43, 2
      %p234 = scmp.ne.s32.totalorder %s229, %s231
      %p235 = scmp.eq.s32.totalorder %s43, 0
      %p236 = por %p234, %p235
      %p237 = scmp.ne.s32.totalorder %s229, %s231
      %p238 = scmp.eq.s32.totalorder %s48, 2
      %p239 = por %p237, %p238
      %p240 = scmp.ne.s32.totalorder %s231, %s232
      %p241 = scmp.eq.s32.totalorder %s48, 0
      %p242 = por %p240, %p241
      %p243 = scmp.ne.s32.totalorder %s231, %s232
      %p244 = scmp.eq.s32.totalorder %s49, 2
      %p245 = por %p243, %p244
      %p247 = scmp.ne.s32.totalorder %s232, %s246
      %p248 = scmp.eq.s32.totalorder %s49, 0
      %p249 = por %p247, %p248
      %s251 = sadd.s32 %s250, 1
      %p254 = scmp.eq.s32.totalorder %s43, 2
      %p255 = scmp.ne.s32.totalorder %s250, %s252
      %p256 = scmp.eq.s32.totalorder %s43, 0
      %p257 = por %p255, %p256
      %p258 = scmp.ne.s32.totalorder %s250, %s252
      %p259 = scmp.eq.s32.totalorder %s48, 2
      %p260 = por %p258, %p259
      %p261 = scmp.ne.s32.totalorder %s252, %s253
      %p262 = scmp.eq.s32.totalorder %s48, 0
      %p263 = por %p261, %p262
      %p264 = scmp.ne.s32.totalorder %s252, %s253
      %p265 = scmp.eq.s32.totalorder %s49, 2
      %p266 = por %p264, %p265
      %p268 = scmp.ne.s32.totalorder %s253, %s267
      %p269 = scmp.eq.s32.totalorder %s49, 0
      %p270 = por %p268, %p269
      %s272 = sadd.s32 %s271, 1
      %p275 = scmp.eq.s32.totalorder %s43, 2
      %p276 = scmp.ne.s32.totalorder %s271, %s273
      %p277 = scmp.eq.s32.totalorder %s43, 0
      %p278 = por %p276, %p277
      %p279 = scmp.ne.s32.totalorder %s271, %s273
      %p280 = scmp.eq.s32.totalorder %s48, 2
      %p281 = por %p279, %p280
      %p282 = scmp.ne.s32.totalorder %s273, %s274
      %p283 = scmp.eq.s32.totalorder %s48, 0
      %p284 = por %p282, %p283
      %p285 = scmp.ne.s32.totalorder %s273, %s274
      %p286 = scmp.eq.s32.totalorder %s49, 2
      %p287 = por %p285, %p286
      %p289 = scmp.ne.s32.totalorder %s274, %s288
      %p290 = scmp.eq.s32.totalorder %s49, 0
      %p291 = por %p289, %p290
      %s293 = sadd.s32 %s292, 1
      %p296 = scmp.eq.s32.totalorder %s43, 2
      %p297 = scmp.ne.s32.totalorder %s292, %s294
      %p298 = scmp.eq.s32.totalorder %s43, 0
      %p299 = por %p297, %p298
      %p300 = scmp.ne.s32.totalorder %s292, %s294
      %p301 = scmp.eq.s32.totalorder %s48, 2
      %p302 = por %p300, %p301
      %p303 = scmp.ne.s32.totalorder %s294, %s295
      %p304 = scmp.eq.s32.totalorder %s48, 0
      %p305 = por %p303, %p304
      %p306 = scmp.ne.s32.totalorder %s294, %s295
      %p307 = scmp.eq.s32.totalorder %s49, 2
      %p308 = por %p306, %p307
      %p310 = scmp.ne.s32.totalorder %s295, %s309
      %p311 = scmp.eq.s32.totalorder %s49, 0
      %p312 = por %p310, %p311
      %s314 = sadd.s32 %s313, 1
      %p317 = scmp.eq.s32.totalorder %s43, 2
      %p318 = scmp.ne.s32.totalorder %s313, %s315
      %p319 = scmp.eq.s32.totalorder %s43, 0
      %p320 = por %p318, %p319
      %p321 = scmp.ne.s32.totalorder %s313, %s315
      %p322 = scmp.eq.s32.totalorder %s48, 2
      %p323 = por %p321, %p322
      %p324 = scmp.ne.s32.totalorder %s315, %s316
      %p325 = scmp.eq.s32.totalorder %s48, 0
      %p326 = por %p324, %p325
      %p327 = scmp.ne.s32.totalorder %s315, %s316
      %p328 = scmp.eq.s32.totalorder %s49, 2
      %p329 = por %p327, %p328
      %p331 = scmp.ne.s32.totalorder %s316, %s330
      %p332 = scmp.eq.s32.totalorder %s49, 0
      %p333 = por %p331, %p332
      %s335 = sadd.s32 %s334, 1
      %p338 = scmp.eq.s32.totalorder %s43, 2
      %p339 = scmp.ne.s32.totalorder %s334, %s336
      %p340 = scmp.eq.s32.totalorder %s43, 0
      %p341 = por %p339, %p340
      %p342 = scmp.ne.s32.totalorder %s334, %s336
      %p343 = scmp.eq.s32.totalorder %s48, 2
      %p344 = por %p342, %p343
      %p345 = scmp.ne.s32.totalorder %s336, %s337
      %p346 = scmp.eq.s32.totalorder %s48, 0
      %p347 = por %p345, %p346
      %p348 = scmp.ne.s32.totalorder %s336, %s337
      %p349 = scmp.eq.s32.totalorder %s49, 2
      %p350 = por %p348, %p349
      %p352 = scmp.ne.s32.totalorder %s337, %s351
      %p353 = scmp.eq.s32.totalorder %s49, 0
      %p354 = por %p352, %p353
      %s356 = sadd.s32 %s355, 1
      %p359 = scmp.eq.s32.totalorder %s43, 2
      %p360 = scmp.ne.s32.totalorder %s355, %s357
      %p361 = scmp.eq.s32.totalorder %s43, 0
      %p362 = por %p360, %p361
      %p363 = scmp.ne.s32.totalorder %s355, %s357
      %p364 = scmp.eq.s32.totalorder %s48, 2
      %p365 = por %p363, %p364
      %p366 = scmp.ne.s32.totalorder %s357, %s358
      %p367 = scmp.eq.s32.totalorder %s48, 0
      %p368 = por %p366, %p367
      %p369 = scmp.ne.s32.totalorder %s357, %s358
      %p370 = scmp.eq.s32.totalorder %s49, 2
      %p371 = por %p369, %p370
      %p373 = scmp.ne.s32.totalorder %s358, %s372
      %p374 = scmp.eq.s32.totalorder %s49, 0
      %p375 = por %p373, %p374
      %s377 = sadd.s32 %s376, 1
      %p380 = scmp.eq.s32.totalorder %s43, 2
      %p381 = scmp.ne.s32.totalorder %s376, %s378
      %p382 = scmp.eq.s32.totalorder %s43, 0
      %p383 = por %p381, %p382
      %p384 = scmp.ne.s32.totalorder %s376, %s378
      %p385 = scmp.eq.s32.totalorder %s48, 2
      %p386 = por %p384, %p385
      %p387 = scmp.ne.s32.totalorder %s378, %s379
      %p388 = scmp.eq.s32.totalorder %s48, 0
      %p389 = por %p387, %p388
      %p390 = scmp.ne.s32.totalorder %s378, %s379
      %p391 = scmp.eq.s32.totalorder %s49, 2
      %p392 = por %p390, %p391
      %p394 = scmp.ne.s32.totalorder %s379, %s393
      %p395 = scmp.eq.s32.totalorder %s49, 0
      %p396 = por %p394, %p395
      %s398 = sadd.s32 %s397, 1
      %p401 = scmp.eq.s32.totalorder %s43, 2
      %p402 = scmp.ne.s32.totalorder %s397, %s399
      %p403 = scmp.eq.s32.totalorder %s43, 0
      %p404 = por %p402, %p403
      %p405 = scmp.ne.s32.totalorder %s397, %s399
      %p406 = scmp.eq.s32.totalorder %s48, 2
      %p407 = por %p405, %p406
      %p408 = scmp.ne.s32.totalorder %s399, %s400
      %p409 = scmp.eq.s32.totalorder %s48, 0
      %p410 = por %p408, %p409
      %p411 = scmp.ne.s32.totalorder %s399, %s400
      %p412 = scmp.eq.s32.totalorder %s49, 2
      %p413 = por %p411, %p412
      %p415 = scmp.ne.s32.totalorder %s400, %s414
      %p416 = scmp.eq.s32.totalorder %s49, 0
      %p417 = por %p415, %p416
      %s419 = sadd.s32 %s418, 1
      %p422 = scmp.eq.s32.totalorder %s43, 2
      %p423 = scmp.ne.s32.totalorder %s418, %s420
      %p424 = scmp.eq.s32.totalorder %s43, 0
      %p425 = por %p423, %p424
      %p426 = scmp.ne.s32.totalorder %s418, %s420
      %p427 = scmp.eq.s32.totalorder %s48, 2
      %p428 = por %p426, %p427
      %p429 = scmp.ne.s32.totalorder %s420, %s421
      %p430 = scmp.eq.s32.totalorder %s48, 0
      %p431 = por %p429, %p430
      %p432 = scmp.ne.s32.totalorder %s420, %s421
      %p433 = scmp.eq.s32.totalorder %s49, 2
      %p434 = por %p432, %p433
      %p436 = scmp.ne.s32.totalorder %s421, %s435
      %p437 = scmp.eq.s32.totalorder %s49, 0
      %p438 = por %p436, %p437
      %s439 = ssub.s32 %s43, %s50
      %p440 = scmp.eq.s32.totalorder %s439, 0
      %s442 = sadd.s32 %s441, 1
      %s443 = scalar_select %p440, %s441, %s442
      %p446 = pneg %p440
      %p447 = scmp.eq.s32.totalorder %s43, 2
      %p448 = por %p446, %p447
      %p449 = scmp.ne.s32.totalorder %s441, %s444
      %p450 = scmp.eq.s32.totalorder %s43, 0
      %p451 = por %p449, %p450
      %p452 = scmp.ne.s32.totalorder %s441, %s444
      %p453 = scmp.eq.s32.totalorder %s48, 2
      %p454 = por %p452, %p453
      %p455 = scmp.ne.s32.totalorder %s444, %s445
      %p456 = scmp.eq.s32.totalorder %s48, 0
      %p457 = por %p455, %p456
      %p458 = scmp.ne.s32.totalorder %s444, %s445
      %p459 = scmp.eq.s32.totalorder %s49, 2
      %p460 = por %p458, %p459
      %p462 = scmp.ne.s32.totalorder %s445, %s461
      %p463 = scmp.eq.s32.totalorder %s49, 0
      %p464 = por %p462, %p463
      %s465 = ssub.s32 %s43, %s50
      %p466 = scmp.eq.s32.totalorder %s465, 0
      %s468 = sadd.s32 %s467, 1
      %s469 = scalar_select %p466, %s467, %s468
      %p472 = pneg %p466
      %p473 = scmp.eq.s32.totalorder %s43, 2
      %p474 = por %p472, %p473
      %p475 = scmp.ne.s32.totalorder %s467, %s470
      %p476 = scmp.eq.s32.totalorder %s43, 0
      %p477 = por %p475, %p476
      %p478 = scmp.ne.s32.totalorder %s467, %s470
      %p479 = scmp.eq.s32.totalorder %s48, 2
      %p480 = por %p478, %p479
      %p481 = scmp.ne.s32.totalorder %s470, %s471
      %p482 = scmp.eq.s32.totalorder %s48, 0
      %p483 = por %p481, %p482
      %p484 = scmp.ne.s32.totalorder %s470, %s471
      %p485 = scmp.eq.s32.totalorder %s49, 2
      %p486 = por %p484, %p485
      %p488 = scmp.ne.s32.totalorder %s471, %s487
      %p489 = scmp.eq.s32.totalorder %s49, 0
      %p490 = por %p488, %p489
      %p491 = scmp.le.s32.totalorder 1, %s43
      %p492 = scmp.lt.s32.totalorder %s43, 4
      %p493 = pnand %p491, %p492
      %p494 = pneg %p493
      // Predicated region
      $region9: #{tpu_custom_call.1} parent=5 // pred_check
        _
      $region10: #{tpu_custom_call.1} parent=5 // pred_check_branch
        %496 = sbr.rel (%p493) target = $region12
      $region11: #{tpu_custom_call.1} parent=5 // pred_region
        %s497 = ssub.s32 %s43, 1
        // Predicated region
        $region13: #{tpu_custom_call.1} parent=11 // pred_check
          %p498 = pneg %p116
        $region14: #{tpu_custom_call.1} parent=11 // pred_check_branch
          %500 = sbr.rel (%p498) target = $region16
        $region15: #{tpu_custom_call.1} parent=11 // pred_region
          %s502 = ssub.s32 4096, 4096
          %503 = vsyncadd [#allocation6], %s502
          %s504 = sshll.u32 [#allocation7], 4
          %s505 = int_to_ptr.vmem [resolvable:$true] %s504
          %510 = dma.hbm_to_vmem [thread:$0]  %s2, 4096, %s505, [#allocation6], 256, 256, 16
        $region16: #{tpu_custom_call.1} parent=11 // pred_fallthru
          _
        // Predicated region
        $region17: #{tpu_custom_call.1} parent=11 // pred_check
          %p511 = pneg %p137
        $region18: #{tpu_custom_call.1} parent=11 // pred_check_branch
          %513 = sbr.rel (%p511) target = $region20
        $region19: #{tpu_custom_call.1} parent=11 // pred_region
          %s515 = ssub.s32 2048, 2048
          %516 = vsyncadd [#allocation9], %s515
          %s517 = sshll.u32 [#allocation8], 4
          %s518 = int_to_ptr.vmem [resolvable:$true] %s517
          %523 = dma.hbm_to_vmem [thread:$0]  %s3, 2048, %s518, [#allocation9], 128, 128, 8
        $region20: #{tpu_custom_call.1} parent=11 // pred_fallthru
          _
        // Predicated region
        $region21: #{tpu_custom_call.1} parent=11 // pred_check
          %p524 = pneg %p158
        $region22: #{tpu_custom_call.1} parent=11 // pred_check_branch
          %526 = sbr.rel (%p524) target = $region24
        $region23: #{tpu_custom_call.1} parent=11 // pred_region
          %s528 = ssub.s32 2048, 2048
          %529 = vsyncadd [#allocation9], %s528
          %s530 = sshll.u32 [#allocation10], 4
          %s531 = int_to_ptr.vmem [resolvable:$true] %s530
          %536 = dma.hbm_to_vmem [thread:$0]  %s4, 2048, %s531, [#allocation9], 128, 128, 8
        $region24: #{tpu_custom_call.1} parent=11 // pred_fallthru
          _
        // Predicated region
        $region25: #{tpu_custom_call.1} parent=11 // pred_check
          %p537 = pneg %p179
        $region26: #{tpu_custom_call.1} parent=11 // pred_check_branch
          %539 = sbr.rel (%p537) target = $region28
        $region27: #{tpu_custom_call.1} parent=11 // pred_region
          %s541 = ssub.s32 2048, 2048
          %542 = vsyncadd [#allocation12], %s541
          %s543 = sshll.u32 [#allocation11], 4
          %s544 = int_to_ptr.vmem [resolvable:$true] %s543
          %549 = dma.hbm_to_vmem [thread:$0]  %s5, 2048, %s544, [#allocation12], 128, 128, 8
        $region28: #{tpu_custom_call.1} parent=11 // pred_fallthru
          _
        // Predicated region
        $region29: #{tpu_custom_call.1} parent=11 // pred_check
          %p550 = pneg %p200
        $region30: #{tpu_custom_call.1} parent=11 // pred_check_branch
          %552 = sbr.rel (%p550) target = $region32
        $region31: #{tpu_custom_call.1} parent=11 // pred_region
          %s554 = ssub.s32 2048, 2048
          %555 = vsyncadd [#allocation12], %s554
          %s556 = sshll.u32 [#allocation13], 4
          %s557 = int_to_ptr.vmem [resolvable:$true] %s556
          %562 = dma.hbm_to_vmem [thread:$0]  %s6, 2048, %s557, [#allocation12], 128, 128, 8
        $region32: #{tpu_custom_call.1} parent=11 // pred_fallthru
          _
        // Predicated region
        $region33: #{tpu_custom_call.1} parent=11 // pred_check
          %p563 = pneg %p221
        $region34: #{tpu_custom_call.1} parent=11 // pred_check_branch
          %565 = sbr.rel (%p563) target = $region36
        $region35: #{tpu_custom_call.1} parent=11 // pred_region
          %s567 = ssub.s32 4096, 4096
          %568 = vsyncadd [#allocation15], %s567
          %s569 = sshll.u32 [#allocation14], 4
          %s570 = int_to_ptr.vmem [resolvable:$true] %s569
          %575 = dma.hbm_to_vmem [thread:$0]  %s7, 4096, %s570, [#allocation15], 256, 256, 16
        $region36: #{tpu_custom_call.1} parent=11 // pred_fallthru
          _
        // Predicated region
        $region37: #{tpu_custom_call.1} parent=11 // pred_check
          %p576 = pneg %p242
        $region38: #{tpu_custom_call.1} parent=11 // pred_check_branch
          %578 = sbr.rel (%p576) target = $region40
        $region39: #{tpu_custom_call.1} parent=11 // pred_region
          %s580 = ssub.s32 2048, 2048
          %581 = vsyncadd [#allocation15], %s580
          %s582 = sshll.u32 [#allocation16], 4
          %s583 = int_to_ptr.vmem [resolvable:$true] %s582
          %588 = dma.hbm_to_vmem [thread:$0]  %s8, 2048, %s583, [#allocation15], 128, 128, 8
        $region40: #{tpu_custom_call.1} parent=11 // pred_fallthru
          _
        // Predicated region
        $region41: #{tpu_custom_call.1} parent=11 // pred_check
          %p589 = pneg %p263
        $region42: #{tpu_custom_call.1} parent=11 // pred_check_branch
          %591 = sbr.rel (%p589) target = $region44
        $region43: #{tpu_custom_call.1} parent=11 // pred_region
          %s593 = ssub.s32 2048, 2048
          %594 = vsyncadd [#allocation18], %s593
          %s595 = sshll.u32 [#allocation17], 4
          %s596 = int_to_ptr.vmem [resolvable:$true] %s595
          %601 = dma.hbm_to_vmem [thread:$0]  %s9, 2048, %s596, [#allocation18], 128, 128, 8
        $region44: #{tpu_custom_call.1} parent=11 // pred_fallthru
          _
        // Predicated region
        $region45: #{tpu_custom_call.1} parent=11 // pred_check
          %p602 = pneg %p284
        $region46: #{tpu_custom_call.1} parent=11 // pred_check_branch
          %604 = sbr.rel (%p602) target = $region48
        $region47: #{tpu_custom_call.1} parent=11 // pred_region
          %s606 = ssub.s32 2048, 2048
          %607 = vsyncadd [#allocation18], %s606
          %s608 = sshll.u32 [#allocation19], 4
          %s609 = int_to_ptr.vmem [resolvable:$true] %s608
          %614 = dma.hbm_to_vmem [thread:$0]  %s10, 2048, %s609, [#allocation18], 128, 128, 8
        $region48: #{tpu_custom_call.1} parent=11 // pred_fallthru
          _
        // Predicated region
        $region49: #{tpu_custom_call.1} parent=11 // pred_check
          %p615 = pneg %p305
        $region50: #{tpu_custom_call.1} parent=11 // pred_check_branch
          %617 = sbr.rel (%p615) target = $region52
        $region51: #{tpu_custom_call.1} parent=11 // pred_region
          %s619 = ssub.s32 2048, 2048
          %620 = vsyncadd [#allocation21], %s619
          %s621 = sshll.u32 [#allocation20], 4
          %s622 = int_to_ptr.vmem [resolvable:$true] %s621
          %627 = dma.hbm_to_vmem [thread:$0]  %s11, 2048, %s622, [#allocation21], 128, 128, 8
        $region52: #{tpu_custom_call.1} parent=11 // pred_fallthru
          _
        // Predicated region
        $region53: #{tpu_custom_call.1} parent=11 // pred_check
          %p628 = pneg %p326
        $region54: #{tpu_custom_call.1} parent=11 // pred_check_branch
          %630 = sbr.rel (%p628) target = $region56
        $region55: #{tpu_custom_call.1} parent=11 // pred_region
          _
        $region56: #{tpu_custom_call.1} parent=11 // pred_fallthru
          _
        // Predicated region
        $region57: #{tpu_custom_call.1} parent=11 // pred_check
          %p631 = pneg %p347
        $region58: #{tpu_custom_call.1} parent=11 // pred_check_branch
          %633 = sbr.rel (%p631) target = $region60
        $region59: #{tpu_custom_call.1} parent=11 // pred_region
          _
        $region60: #{tpu_custom_call.1} parent=11 // pred_fallthru
          _
        // Predicated region
        $region61: #{tpu_custom_call.1} parent=11 // pred_check
          %p634 = pneg %p368
        $region62: #{tpu_custom_call.1} parent=11 // pred_check_branch
          %636 = sbr.rel (%p634) target = $region64
        $region63: #{tpu_custom_call.1} parent=11 // pred_region
          _
        $region64: #{tpu_custom_call.1} parent=11 // pred_fallthru
          _
        // Predicated region
        $region65: #{tpu_custom_call.1} parent=11 // pred_check
          %p637 = pneg %p389
        $region66: #{tpu_custom_call.1} parent=11 // pred_check_branch
          %639 = sbr.rel (%p637) target = $region68
        $region67: #{tpu_custom_call.1} parent=11 // pred_region
          _
        $region68: #{tpu_custom_call.1} parent=11 // pred_fallthru
          _
        // Predicated region
        $region69: #{tpu_custom_call.1} parent=11 // pred_check
          %p640 = pneg %p410
        $region70: #{tpu_custom_call.1} parent=11 // pred_check_branch
          %642 = sbr.rel (%p640) target = $region72
        $region71: #{tpu_custom_call.1} parent=11 // pred_region
          _
        $region72: #{tpu_custom_call.1} parent=11 // pred_fallthru
          _
        // Predicated region
        $region73: #{tpu_custom_call.1} parent=11 // pred_check
          %p643 = pneg %p431
        $region74: #{tpu_custom_call.1} parent=11 // pred_check_branch
          %645 = sbr.rel (%p643) target = $region76
        $region75: #{tpu_custom_call.1} parent=11 // pred_region
          _
        $region76: #{tpu_custom_call.1} parent=11 // pred_fallthru
          _
      $region12: #{tpu_custom_call.1} parent=5 // pred_fallthru
        _
      %p646 = scmp.lt.s32.totalorder %s43, 3
      // Predicated region
      $region77: #{tpu_custom_call.1} parent=5 // pred_check
        %p647 = pneg %p646
      $region78: #{tpu_custom_call.1} parent=5 // pred_check_branch
        %649 = sbr.rel (%p647) target = $region80
      $region79: #{tpu_custom_call.1} parent=5 // pred_region
        // Predicated region
        $region81: #{tpu_custom_call.1} parent=79 // pred_check
          %p650 = pneg %p63
        $region82: #{tpu_custom_call.1} parent=79 // pred_check_branch
          %652 = sbr.rel (%p650) target = $region84
        $region83: #{tpu_custom_call.1} parent=79 // pred_region
          %s653 = sand.u32 %s53, 1
          %s654 = scalar_lea.sflag [#allocation3], %s653
          %s655 = sand.u32 %s53, 1
          %s656 = smul.addr %s655, 16
          %s657 = scalar_lea.vmem [#allocation2], %s656
          %s658 = smul.u32 2, %s43
          %s660 = ssub.s32 256, 256
          %661 = vsyncadd %s654, %s660
          %s662 = smul.addr %s658, 128
          %s663 = scalar_lea.hbm %s0, %s662
          %s664 = sshll.u32 %s657, 4
          %s665 = int_to_ptr.vmem [resolvable:$true] %s664
          %670 = dma.hbm_to_vmem [thread:$0]  %s663, 256, %s665, %s654, 128, 128, 8
        $region84: #{tpu_custom_call.1} parent=79 // pred_fallthru
          _
        // Predicated region
        $region85: #{tpu_custom_call.1} parent=79 // pred_check
          %p671 = pneg %p89
        $region86: #{tpu_custom_call.1} parent=79 // pred_check_branch
          %673 = sbr.rel (%p671) target = $region88
        $region87: #{tpu_custom_call.1} parent=79 // pred_region
          #allocation26 [shape = 'u32[6]{0}', space=smem, size = 0x18, scoped, tag = 'DMA stride descriptor']
          %s674 = sand.u32 %s43, 1
          %s675 = scalar_lea.sflag [#allocation6], %s674
          %s676 = sand.u32 %s79, 1
          %s677 = smul.addr %s676, 48
          %s678 = scalar_lea.vmem [#allocation5], %s677
          %s679 = smul.u32 2, %s43
          %s681 = ssub.s32 768, 768
          %682 = vsyncadd %s675, %s681
          %s683 = smul.addr %s679, 128
          %s684 = scalar_lea.hbm %s1, %s683
          %s686 = sshll.u32 1, 14
          %s687 = sxor.u32 4294967295, %s686
          %s689 = sld [smem:[#allocation0]]
          %s690 = sadd.s32 2, %s689
          %s692 = sshll.u32 7, 26
          %s693 = sxor.u32 4294967295, %s692
          %s694 = sand.u32 0, %s693
          %s695 = sshll.u32 %s690, 26
          %s696 = sor.u32 %s694, %s695
          %s697 = sshll.u32 %s678, 4
          %s698 = int_to_ptr.vmem [resolvable:$true] %s697
          %704 = sst [smem:[#allocation26]] 768
          %s705 = scalar_lea.smem [#allocation26], 1
          %706 = sst [smem:[%s705]] 256
          %s707 = scalar_lea.smem [#allocation26], 2
          %708 = sst [smem:[%s707]] 2
          %s709 = scalar_lea.smem [#allocation26], 3
          %710 = sst [smem:[%s709]] 128
          %s711 = scalar_lea.smem [#allocation26], 4
          %712 = sst [smem:[%s711]] 128
          %s713 = scalar_lea.smem [#allocation26], 5
          %714 = sst [smem:[%s713]] 8
          %716 = dma.general %s684, 768, %s698, %s675, [#allocation25], [#allocation26], %s696, 0
        $region88: #{tpu_custom_call.1} parent=79 // pred_fallthru
          _
      $region80: #{tpu_custom_call.1} parent=5 // pred_fallthru
        _
      %p717 = scmp.le.s32.totalorder 1, %s43
      %p718 = scmp.lt.s32.totalorder %s43, 4
      %p719 = pnand %p717, %p718
      %p720 = pneg %p719
      // Predicated region
      $region89: #{tpu_custom_call.1} parent=5 // pred_check
        _
      $region90: #{tpu_custom_call.1} parent=5 // pred_check_branch
        %722 = sbr.rel (%p719) target = $region92
      $region91: #{tpu_custom_call.1} parent=5 // pred_region
        %s723 = ssub.s32 %s43, 1
        %s724 = sand.u32 %s56, 1
        %s725 = scalar_lea.sflag [#allocation3], %s724
        %s726 = sand.u32 %s56, 1
        %s727 = smul.addr %s726, 16
        %s728 = scalar_lea.vmem [#allocation2], %s727
        // Predicated region
        $region93: #{tpu_custom_call.1} parent=91 // pred_check
          %p729 = pneg %p69
        $region94: #{tpu_custom_call.1} parent=91 // pred_check_branch
          %731 = sbr.rel (%p729) target = $region96
        $region95: #{tpu_custom_call.1} parent=91 // pred_region
          %732 = dma.done %s725, 256
        $region96: #{tpu_custom_call.1} parent=91 // pred_fallthru
          _
        %s733 = sand.u32 %s48, 1
        %s734 = scalar_lea.sflag [#allocation6], %s733
        %s735 = sand.u32 %s82, 1
        %s736 = smul.addr %s735, 48
        %s737 = scalar_lea.vmem [#allocation5], %s736
        // Predicated region
        $region97: #{tpu_custom_call.1} parent=91 // pred_check
          %p738 = pneg %p95
        $region98: #{tpu_custom_call.1} parent=91 // pred_check_branch
          %740 = sbr.rel (%p738) target = $region100
        $region99: #{tpu_custom_call.1} parent=91 // pred_region
          %741 = dma.done %s734, 768
        $region100: #{tpu_custom_call.1} parent=91 // pred_fallthru
          _
        // Predicated region
        $region101: #{tpu_custom_call.1} parent=91 // pred_check
          %p742 = pneg %p116
        $region102: #{tpu_custom_call.1} parent=91 // pred_check_branch
          %744 = sbr.rel (%p742) target = $region104
        $region103: #{tpu_custom_call.1} parent=91 // pred_region
          %745 = dma.done [#allocation6], 4096
        $region104: #{tpu_custom_call.1} parent=91 // pred_fallthru
          _
        // Predicated region
        $region105: #{tpu_custom_call.1} parent=91 // pred_check
          %p746 = pneg %p137
        $region106: #{tpu_custom_call.1} parent=91 // pred_check_branch
          %748 = sbr.rel (%p746) target = $region108
        $region107: #{tpu_custom_call.1} parent=91 // pred_region
          %749 = dma.done [#allocation9], 2048
        $region108: #{tpu_custom_call.1} parent=91 // pred_fallthru
          _
        // Predicated region
        $region109: #{tpu_custom_call.1} parent=91 // pred_check
          %p750 = pneg %p158
        $region110: #{tpu_custom_call.1} parent=91 // pred_check_branch
          %752 = sbr.rel (%p750) target = $region112
        $region111: #{tpu_custom_call.1} parent=91 // pred_region
          %753 = dma.done [#allocation9], 2048
        $region112: #{tpu_custom_call.1} parent=91 // pred_fallthru
          _
        // Predicated region
        $region113: #{tpu_custom_call.1} parent=91 // pred_check
          %p754 = pneg %p179
        $region114: #{tpu_custom_call.1} parent=91 // pred_check_branch
          %756 = sbr.rel (%p754) target = $region116
        $region115: #{tpu_custom_call.1} parent=91 // pred_region
          %757 = dma.done [#allocation12], 2048
        $region116: #{tpu_custom_call.1} parent=91 // pred_fallthru
          _
        // Predicated region
        $region117: #{tpu_custom_call.1} parent=91 // pred_check
          %p758 = pneg %p200
        $region118: #{tpu_custom_call.1} parent=91 // pred_check_branch
          %760 = sbr.rel (%p758) target = $region120
        $region119: #{tpu_custom_call.1} parent=91 // pred_region
          %761 = dma.done [#allocation12], 2048
        $region120: #{tpu_custom_call.1} parent=91 // pred_fallthru
          _
        // Predicated region
        $region121: #{tpu_custom_call.1} parent=91 // pred_check
          %p762 = pneg %p221
        $region122: #{tpu_custom_call.1} parent=91 // pred_check_branch
          %764 = sbr.rel (%p762) target = $region124
        $region123: #{tpu_custom_call.1} parent=91 // pred_region
          %765 = dma.done [#allocation15], 4096
        $region124: #{tpu_custom_call.1} parent=91 // pred_fallthru
          _
        // Predicated region
        $region125: #{tpu_custom_call.1} parent=91 // pred_check
          %p766 = pneg %p242
        $region126: #{tpu_custom_call.1} parent=91 // pred_check_branch
          %768 = sbr.rel (%p766) target = $region128
        $region127: #{tpu_custom_call.1} parent=91 // pred_region
          %769 = dma.done [#allocation15], 2048
        $region128: #{tpu_custom_call.1} parent=91 // pred_fallthru
          _
        // Predicated region
        $region129: #{tpu_custom_call.1} parent=91 // pred_check
          %p770 = pneg %p263
        $region130: #{tpu_custom_call.1} parent=91 // pred_check_branch
          %772 = sbr.rel (%p770) target = $region132
        $region131: #{tpu_custom_call.1} parent=91 // pred_region
          %773 = dma.done [#allocation18], 2048
        $region132: #{tpu_custom_call.1} parent=91 // pred_fallthru
          _
        // Predicated region
        $region133: #{tpu_custom_call.1} parent=91 // pred_check
          %p774 = pneg %p284
        $region134: #{tpu_custom_call.1} parent=91 // pred_check_branch
          %776 = sbr.rel (%p774) target = $region136
        $region135: #{tpu_custom_call.1} parent=91 // pred_region
          %777 = dma.done [#allocation18], 2048
        $region136: #{tpu_custom_call.1} parent=91 // pred_fallthru
          _
        // Predicated region
        $region137: #{tpu_custom_call.1} parent=91 // pred_check
          %p778 = pneg %p305
        $region138: #{tpu_custom_call.1} parent=91 // pred_check_branch
          %780 = sbr.rel (%p778) target = $region140
        $region139: #{tpu_custom_call.1} parent=91 // pred_region
          %781 = dma.done [#allocation21], 2048
        $region140: #{tpu_custom_call.1} parent=91 // pred_fallthru
          _
        %s782 = sand.u32 %s56, 1
        %s783 = scalar_lea.sflag [#allocation3], %s782
        %s784 = sand.u32 %s56, 1
        %s785 = smul.addr %s784, 16
        %s786 = scalar_lea.vmem [#allocation2], %s785
        %p787 = pneg %p69
        %p788 = pneg %p66
        %s789 = sand.u32 %s48, 1
        %s790 = scalar_lea.sflag [#allocation6], %s789
        %s791 = sand.u32 %s82, 1
        %s792 = smul.addr %s791, 48
        %s793 = scalar_lea.vmem [#allocation5], %s792
        %p794 = pneg %p95
        %p795 = pneg %p92
        %p796 = pneg %p116
        %p797 = pneg %p113
        %p798 = pneg %p137
        %p799 = pneg %p134
        %p800 = pneg %p158
        %p801 = pneg %p155
        %p802 = pneg %p179
        %p803 = pneg %p176
        %p804 = pneg %p200
        %p805 = pneg %p197
        %p806 = pneg %p221
        %p807 = pneg %p218
        %p808 = pneg %p242
        %p809 = pneg %p239
        %p810 = pneg %p263
        %p811 = pneg %p260
        %p812 = pneg %p284
        %p813 = pneg %p281
        %p814 = pneg %p305
        %p815 = pneg %p302
        %p816 = pneg %p326
        %p817 = pneg %p323
        %p818 = pneg %p347
        %p819 = pneg %p344
        %p820 = pneg %p368
        %p821 = pneg %p365
        %p822 = pneg %p389
        %p823 = pneg %p386
        %p824 = pneg %p410
        %p825 = pneg %p407
        %p826 = pneg %p431
        %p827 = pneg %p428
        %p828 = pneg %p457
        %p829 = pneg %p454
        %s830 = sand.u32 %s444, 1
        %s831 = scalar_lea.sflag [#allocation4], %s830
        %s832 = sand.u32 %s444, 1
        %s833 = smul.addr %s832, 16
        %s834 = scalar_lea.vmem [#allocation22], %s833
        %p835 = pneg %p483
        %p836 = pneg %p480
        %s837 = sand.u32 %s470, 1
        %s838 = scalar_lea.sflag [#allocation24], %s837
        %s839 = sand.u32 %s470, 1
        %s840 = smul.addr %s839, 48
        %s841 = scalar_lea.vmem [#allocation23], %s840
        %s842 = smul.u32 2, %s48
        %s843 = smul.u32 2, %s48
        %s844 = smul.u32 2, %s48
        %s845 = smul.u32 2, %s48
        %v846 = vld [vmem:[%s728] sm:$0xff]
        %v847 = vld [vmem:[%s728 + $0x8] sm:$0xff]
        %v848 = vld [vmem:[%s737] sm:$0xff]
        %v849 = vld [vmem:[%s737 + $0x8] sm:$0xff]
        %s850 = scalar_lea.vmem %s737, 16 [#allocation5]
        %v851 = vld [vmem:[%s850] sm:$0xff]
        %v852 = vld [vmem:[%s850 + $0x8] sm:$0xff]
        %s853 = scalar_lea.vmem %s737, 32 [#allocation5]
        %v854 = vld [vmem:[%s853] sm:$0xff]
        %v855 = vld [vmem:[%s853 + $0x8] sm:$0xff]
        %v856 = vld [vmem:[#allocation7] sm:$0xff]
        %v857 = vld [vmem:[#allocation7 + $0x8] sm:$0xff]
        %v858 = vld [vmem:[#allocation7 + $0x10] sm:$0xff]
        %v859 = vld [vmem:[#allocation7 + $0x18] sm:$0xff]
        %v860 = vld [vmem:[#allocation7 + $0x20] sm:$0xff]
        %v861 = vld [vmem:[#allocation7 + $0x28] sm:$0xff]
        %v862 = vld [vmem:[#allocation7 + $0x30] sm:$0xff]
        %v863 = vld [vmem:[#allocation7 + $0x38] sm:$0xff]
        %v864 = vld [vmem:[#allocation7 + $0x40] sm:$0xff]
        %v865 = vld [vmem:[#allocation7 + $0x48] sm:$0xff]
        %v866 = vld [vmem:[#allocation7 + $0x50] sm:$0xff]
        %v867 = vld [vmem:[#allocation7 + $0x58] sm:$0xff]
        %v868 = vld [vmem:[#allocation7 + $0x60] sm:$0xff]
        %v869 = vld [vmem:[#allocation7 + $0x68] sm:$0xff]
        %v870 = vld [vmem:[#allocation7 + $0x70] sm:$0xff]
        %v871 = vld [vmem:[#allocation7 + $0x78] sm:$0xff]
        %v872 = vld [vmem:[#allocation7 + $0x80] sm:$0xff]
        %v873 = vld [vmem:[#allocation7 + $0x88] sm:$0xff]
        %v874 = vld [vmem:[#allocation7 + $0x90] sm:$0xff]
        %v875 = vld [vmem:[#allocation7 + $0x98] sm:$0xff]
        %v876 = vld [vmem:[#allocation7 + $0xa0] sm:$0xff]
        %v877 = vld [vmem:[#allocation7 + $0xa8] sm:$0xff]
        %v878 = vld [vmem:[#allocation7 + $0xb0] sm:$0xff]
        %v879 = vld [vmem:[#allocation7 + $0xb8] sm:$0xff]
        %v880 = vld [vmem:[#allocation7 + $0xc0] sm:$0xff]
        %v881 = vld [vmem:[#allocation7 + $0xc8] sm:$0xff]
        %v882 = vld [vmem:[#allocation7 + $0xd0] sm:$0xff]
        %v883 = vld [vmem:[#allocation7 + $0xd8] sm:$0xff]
        %v884 = vld [vmem:[#allocation7 + $0xe0] sm:$0xff]
        %v885 = vld [vmem:[#allocation7 + $0xe8] sm:$0xff]
        %v886 = vld [vmem:[#allocation7 + $0xf0] sm:$0xff]
        %v887 = vld [vmem:[#allocation7 + $0xf8] sm:$0xff]
        %v888 = vld [vmem:[#allocation8] sm:$0xff]
        %v889 = vld [vmem:[#allocation8 + $0x8] sm:$0xff]
        %v890 = vld [vmem:[#allocation8 + $0x10] sm:$0xff]
        %v891 = vld [vmem:[#allocation8 + $0x18] sm:$0xff]
        %v892 = vld [vmem:[#allocation8 + $0x20] sm:$0xff]
        %v893 = vld [vmem:[#allocation8 + $0x28] sm:$0xff]
        %v894 = vld [vmem:[#allocation8 + $0x30] sm:$0xff]
        %v895 = vld [vmem:[#allocation8 + $0x38] sm:$0xff]
        %v896 = vld [vmem:[#allocation8 + $0x40] sm:$0xff]
        %v897 = vld [vmem:[#allocation8 + $0x48] sm:$0xff]
        %v898 = vld [vmem:[#allocation8 + $0x50] sm:$0xff]
        %v899 = vld [vmem:[#allocation8 + $0x58] sm:$0xff]
        %v900 = vld [vmem:[#allocation8 + $0x60] sm:$0xff]
        %v901 = vld [vmem:[#allocation8 + $0x68] sm:$0xff]
        %v902 = vld [vmem:[#allocation8 + $0x70] sm:$0xff]
        %v903 = vld [vmem:[#allocation8 + $0x78] sm:$0xff]
        %v904 = vld [vmem:[#allocation10] sm:$0xff]
        %v905 = vld [vmem:[#allocation10 + $0x8] sm:$0xff]
        %v906 = vld [vmem:[#allocation10 + $0x10] sm:$0xff]
        %v907 = vld [vmem:[#allocation10 + $0x18] sm:$0xff]
        %v908 = vld [vmem:[#allocation10 + $0x20] sm:$0xff]
        %v909 = vld [vmem:[#allocation10 + $0x28] sm:$0xff]
        %v910 = vld [vmem:[#allocation10 + $0x30] sm:$0xff]
        %v911 = vld [vmem:[#allocation10 + $0x38] sm:$0xff]
        %v912 = vld [vmem:[#allocation10 + $0x40] sm:$0xff]
        %v913 = vld [vmem:[#allocation10 + $0x48] sm:$0xff]
        %v914 = vld [vmem:[#allocation10 + $0x50] sm:$0xff]
        %v915 = vld [vmem:[#allocation10 + $0x58] sm:$0xff]
        %v916 = vld [vmem:[#allocation10 + $0x60] sm:$0xff]
        %v917 = vld [vmem:[#allocation10 + $0x68] sm:$0xff]
        %v918 = vld [vmem:[#allocation10 + $0x70] sm:$0xff]
        %v919 = vld [vmem:[#allocation10 + $0x78] sm:$0xff]
        %v920 = vld [vmem:[%s12] sm:$0x1]
        %v921 = vld [vmem:[#allocation11] sm:$0xff]
        %v922 = vld [vmem:[#allocation11 + $0x8] sm:$0xff]
        %v923 = vld [vmem:[#allocation11 + $0x10] sm:$0xff]
        %v924 = vld [vmem:[#allocation11 + $0x18] sm:$0xff]
        %v925 = vld [vmem:[#allocation11 + $0x20] sm:$0xff]
        %v926 = vld [vmem:[#allocation11 + $0x28] sm:$0xff]
        %v927 = vld [vmem:[#allocation11 + $0x30] sm:$0xff]
        %v928 = vld [vmem:[#allocation11 + $0x38] sm:$0xff]
        %v929 = vld [vmem:[#allocation11 + $0x40] sm:$0xff]
        %v930 = vld [vmem:[#allocation11 + $0x48] sm:$0xff]
        %v931 = vld [vmem:[#allocation11 + $0x50] sm:$0xff]
        %v932 = vld [vmem:[#allocation11 + $0x58] sm:$0xff]
        %v933 = vld [vmem:[#allocation11 + $0x60] sm:$0xff]
        %v934 = vld [vmem:[#allocation11 + $0x68] sm:$0xff]
        %v935 = vld [vmem:[#allocation11 + $0x70] sm:$0xff]
        %v936 = vld [vmem:[#allocation11 + $0x78] sm:$0xff]
        %v937 = vld [vmem:[%s13] sm:$0x1]
        %v938 = vld [vmem:[#allocation13] sm:$0xff]
        %v939 = vld [vmem:[#allocation13 + $0x8] sm:$0xff]
        %v940 = vld [vmem:[#allocation13 + $0x10] sm:$0xff]
        %v941 = vld [vmem:[#allocation13 + $0x18] sm:$0xff]
        %v942 = vld [vmem:[#allocation13 + $0x20] sm:$0xff]
        %v943 = vld [vmem:[#allocation13 + $0x28] sm:$0xff]
        %v944 = vld [vmem:[#allocation13 + $0x30] sm:$0xff]
        %v945 = vld [vmem:[#allocation13 + $0x38] sm:$0xff]
        %v946 = vld [vmem:[#allocation13 + $0x40] sm:$0xff]
        %v947 = vld [vmem:[#allocation13 + $0x48] sm:$0xff]
        %v948 = vld [vmem:[#allocation13 + $0x50] sm:$0xff]
        %v949 = vld [vmem:[#allocation13 + $0x58] sm:$0xff]
        %v950 = vld [vmem:[#allocation13 + $0x60] sm:$0xff]
        %v951 = vld [vmem:[#allocation13 + $0x68] sm:$0xff]
        %v952 = vld [vmem:[#allocation13 + $0x70] sm:$0xff]
        %v953 = vld [vmem:[#allocation13 + $0x78] sm:$0xff]
        %v954 = vld [vmem:[%s14] sm:$0x1]
        %955 = vmatprep.subr.mxu0 %v857
        %956 = vmatpush1.msra.mxu0 %v856
        %957 = vmatprep.subr.mxu0 %v859
        %958 = vmatpush1.msra.mxu0 %v858
        %959 = vmatprep.subr.mxu0 %v861
        %960 = vmatpush1.msra.mxu0 %v860
        %961 = vmatprep.subr.mxu0 %v863
        %962 = vmatpush1.msra.mxu0 %v862
        %963 = vmatprep.subr.mxu0 %v865
        %964 = vmatpush1.msra.mxu0 %v864
        %965 = vmatprep.subr.mxu0 %v867
        %966 = vmatpush1.msra.mxu0 %v866
        %967 = vmatprep.subr.mxu0 %v869
        %968 = vmatpush1.msra.mxu0 %v868
        %969 = vmatprep.subr.mxu0 %v871
        %970 = vmatpush1.msra.mxu0 %v870
        %971 = vmatprep.subr.mxu0 %v873
        %972 = vmatpush1.msra.mxu0 %v872
        %973 = vmatprep.subr.mxu0 %v875
        %974 = vmatpush1.msra.mxu0 %v874
        %975 = vmatprep.subr.mxu0 %v877
        %976 = vmatpush1.msra.mxu0 %v876
        %977 = vmatprep.subr.mxu0 %v879
        %978 = vmatpush1.msra.mxu0 %v878
        %979 = vmatprep.subr.mxu0 %v881
        %980 = vmatpush1.msra.mxu0 %v880
        %981 = vmatprep.subr.mxu0 %v883
        %982 = vmatpush1.msra.mxu0 %v882
        %983 = vmatprep.subr.mxu0 %v885
        %984 = vmatpush1.msra.mxu0 %v884
        %985 = vmatprep.subr.mxu0 %v887
        %986 = vmatpush1.msra.mxu0 %v886
        %987 = vmatprep.subr.mxu0 0.0
        %988 = vmatpush1.msra.mxu0 0.0
        %989 = vmatprep.subr.mxu0 0.0
        %990 = vmatpush1.msra.mxu0 0.0
        %991 = vmatprep.subr.mxu0 0.0
        %992 = vmatpush1.msra.mxu0 0.0
        %993 = vmatprep.subr.mxu0 0.0
        %994 = vmatpush1.msra.mxu0 0.0
        %995 = vmatprep.subr.mxu0 0.0
        %996 = vmatpush1.msra.mxu0 0.0
        %997 = vmatprep.subr.mxu0 0.0
        %998 = vmatpush1.msra.mxu0 0.0
        %999 = vmatprep.subr.mxu0 0.0
        %1000 = vmatpush1.msra.mxu0 0.0
        %1001 = vmatprep.subr.mxu0 0.0
        %1002 = vmatpush1.msra.mxu0 0.0
        %1003 = vmatprep.subr.mxu0 0.0
        %1004 = vmatpush1.msra.mxu0 0.0
        %1005 = vmatprep.subr.mxu0 0.0
        %1006 = vmatpush1.msra.mxu0 0.0
        %1007 = vmatprep.subr.mxu0 0.0
        %1008 = vmatpush1.msra.mxu0 0.0
        %1009 = vmatprep.subr.mxu0 0.0
        %1010 = vmatpush1.msra.mxu0 0.0
        %1011 = vmatprep.subr.mxu0 0.0
        %1012 = vmatpush1.msra.mxu0 0.0
        %1013 = vmatprep.subr.mxu0 0.0
        %1014 = vmatpush1.msra.mxu0 0.0
        %1015 = vmatprep.subr.mxu0 0.0
        %1016 = vmatpush1.msra.mxu0 0.0
        %1017 = vmatprep.subr.mxu0 0.0
        %1018 = vmatpush1.msra.mxu0 0.0
        %1019 = vmatprep.mubr.f32.mxu0 0.0
        %1020 = vmatmul.mubr.f32.gmra.mrb[0].mxu0 %v848
        %v1021 = vpop.f32.mrb[0].mxu0
        %v1022 = vadd.f32 0.0, %v1021
        %v1023 = vpop.f32.mrb[0].mxu0
        %v1024 = vadd.f32 0.0, %v1023
        %1025 = vmatprep.mubr.f32.mxu0 0.0
        %1026 = vmatmul.mubr.f32.gmra.mrb[0].mxu0 %v849
        %v1027 = vpop.f32.mrb[0].mxu0
        %v1028 = vadd.f32 0.0, %v1027
        %v1029 = vpop.f32.mrb[0].mxu0
        %v1030 = vadd.f32 0.0, %v1029
        %1031 = vmatprep.mubr.f32.mxu0 0.0
        %1032 = vmatmul.mubr.f32.gmra.mrb[0].mxu0 %v851
        %v1033 = vpop.f32.mrb[0].mxu0
        %v1034 = vadd.f32 0.0, %v1033
        %v1035 = vpop.f32.mrb[0].mxu0
        %v1036 = vadd.f32 0.0, %v1035
        %1037 = vmatprep.mubr.f32.mxu0 0.0
        %1038 = vmatmul.mubr.f32.gmra.mrb[0].mxu0 %v852
        %v1039 = vpop.f32.mrb[0].mxu0
        %v1040 = vadd.f32 0.0, %v1039
        %v1041 = vpop.f32.mrb[0].mxu0
        %v1042 = vadd.f32 0.0, %v1041
        %1043 = vmatprep.mubr.f32.mxu0 0.0
        %1044 = vmatmul.mubr.f32.gmra.mrb[0].mxu0 %v854
        %v1045 = vpop.f32.mrb[0].mxu0
        %v1046 = vadd.f32 0.0, %v1045
        %v1047 = vpop.f32.mrb[0].mxu0
        %v1048 = vadd.f32 0.0, %v1047
        %1049 = vmatprep.mubr.f32.mxu0 0.0
        %1050 = vmatmul.mubr.f32.gmra.mrb[0].mxu0 %v855
        %v1051 = vpop.f32.mrb[0].mxu0
        %v1052 = vadd.f32 0.0, %v1051
        %v1053 = vpop.f32.mrb[0].mxu0
        %v1054 = vadd.f32 0.0, %v1053
        %1055 = vdwg.mxu0
        %v1056 = vmul.f32 %v1022, %v1022
        %v1057 = vmul.f32 %v1028, %v1028
        %v1058 = vmul.f32 %v1034, %v1034
        %v1059 = vmul.f32 %v1040, %v1040
        %v1060 = vmul.f32 %v1046, %v1046
        %v1061 = vmul.f32 %v1052, %v1052
        %v1062 = vadd.f32 %v1056, %v1058
        %v1063 = vadd.f32 %v1057, %v1059
        %v1064 = vadd.f32 %v1062, %v1060
        %v1065 = vadd.f32 %v1063, %v1061
        %v1066 = vrsqrt.pop %v1064
        %v1067 = vmul.f32 %v1064, %v1066
        %vm1068 = vcmp.eq.f32.partialorder %v1064, inf
        %v1069 = vsel %vm1068, %v1064, %v1067
        %vm1070 = vcmp.eq.f32.partialorder %v1064, 0.0
        %v1071 = vand.u32 %v1064, 2147483648
        %v1072 = vsel %vm1070, %v1071, %v1069
        %v1073 = vrsqrt.pop %v1065
        %v1074 = vmul.f32 %v1065, %v1073
        %vm1075 = vcmp.eq.f32.partialorder %v1065, inf
        %v1076 = vsel %vm1075, %v1065, %v1074
        %vm1077 = vcmp.eq.f32.partialorder %v1065, 0.0
        %v1078 = vand.u32 %v1065, 2147483648
        %v1079 = vsel %vm1077, %v1078, %v1076
        %1080 = vmatprep.subr.mxu0 0.0
        %1081 = vmatpush1.msra.mxu0 %v904
        %1082 = vmatprep.subr.mxu0 0.0
        %1083 = vmatpush1.msra.mxu0 %v905
        %1084 = vmatprep.subr.mxu0 0.0
        %1085 = vmatpush1.msra.mxu0 %v906
        %1086 = vmatprep.subr.mxu0 0.0
        %1087 = vmatpush1.msra.mxu0 %v907
        %1088 = vmatprep.subr.mxu0 0.0
        %1089 = vmatpush1.msra.mxu0 %v908
        %1090 = vmatprep.subr.mxu0 0.0
        %1091 = vmatpush1.msra.mxu0 %v909
        %1092 = vmatprep.subr.mxu0 0.0
        %1093 = vmatpush1.msra.mxu0 %v910
        %1094 = vmatprep.subr.mxu0 0.0
        %1095 = vmatpush1.msra.mxu0 %v911
        %1096 = vmatprep.subr.mxu0 0.0
        %1097 = vmatpush1.msra.mxu0 %v912
        %1098 = vmatprep.subr.mxu0 0.0
        %1099 = vmatpush1.msra.mxu0 %v913
        %1100 = vmatprep.subr.mxu0 0.0
        %1101 = vmatpush1.msra.mxu0 %v914
        %1102 = vmatprep.subr.mxu0 0.0
        %1103 = vmatpush1.msra.mxu0 %v915
        %1104 = vmatprep.subr.mxu0 0.0
        %1105 = vmatpush1.msra.mxu0 %v916
        %1106 = vmatprep.subr.mxu0 0.0
        %1107 = vmatpush1.msra.mxu0 %v917
        %1108 = vmatprep.subr.mxu0 0.0
        %1109 = vmatpush1.msra.mxu0 %v918
        %1110 = vmatprep.subr.mxu0 0.0
        %1111 = vmatpush1.msra.mxu0 %v919
        %1112 = vmatprep.subr.mxu0 0.0
        %1113 = vmatpush1.msra.mxu0 0.0
        %1114 = vmatprep.subr.mxu0 0.0
        %1115 = vmatpush1.msra.mxu0 0.0
        %1116 = vmatprep.subr.mxu0 0.0
        %1117 = vmatpush1.msra.mxu0 0.0
        %1118 = vmatprep.subr.mxu0 0.0
        %1119 = vmatpush1.msra.mxu0 0.0
        %1120 = vmatprep.subr.mxu0 0.0
        %1121 = vmatpush1.msra.mxu0 0.0
        %1122 = vmatprep.subr.mxu0 0.0
        %1123 = vmatpush1.msra.mxu0 0.0
        %1124 = vmatprep.subr.mxu0 0.0
        %1125 = vmatpush1.msra.mxu0 0.0
        %1126 = vmatprep.subr.mxu0 0.0
        %1127 = vmatpush1.msra.mxu0 0.0
        %1128 = vmatprep.subr.mxu0 0.0
        %1129 = vmatpush1.msra.mxu0 0.0
        %1130 = vmatprep.subr.mxu0 0.0
        %1131 = vmatpush1.msra.mxu0 0.0
        %1132 = vmatprep.subr.mxu0 0.0
        %1133 = vmatpush1.msra.mxu0 0.0
        %1134 = vmatprep.subr.mxu0 0.0
        %1135 = vmatpush1.msra.mxu0 0.0
        %1136 = vmatprep.subr.mxu0 0.0
        %1137 = vmatpush1.msra.mxu0 0.0
        %1138 = vmatprep.subr.mxu0 0.0
        %1139 = vmatpush1.msra.mxu0 0.0
        %1140 = vmatprep.subr.mxu0 0.0
        %1141 = vmatpush1.msra.mxu0 0.0
        %1142 = vmatprep.subr.mxu0 0.0
        %1143 = vmatpush1.msra.mxu0 0.0
        %1144 = vmatprep.mubr.f32.mxu0 0.0
        %1145 = vmatmul.mubr.f32.gmra.mrb[0].mxu0 %v1072
        %v1146 = vpop.f32.mrb[0].mxu0
        %v1147 = vadd.f32 0.0, %v1146
        %v1148 = vpop.f32.mrb[0].mxu0
        %1149 = vmatprep.mubr.f32.mxu0 0.0
        %1150 = vmatmul.mubr.f32.gmra.mrb[0].mxu0 %v1079
        %v1151 = vpop.f32.mrb[0].mxu0
        %v1152 = vadd.f32 0.0, %v1151
        %v1153 = vpop.f32.mrb[0].mxu0
        %1154 = vdwg.mxu0
        %1155 = vmatprep.subr.mxu0 0.0
        %1156 = vmatpush1.msra.mxu0 %v888
        %1157 = vmatprep.subr.mxu0 0.0
        %1158 = vmatpush1.msra.mxu0 %v889
        %1159 = vmatprep.subr.mxu0 0.0
        %1160 = vmatpush1.msra.mxu0 %v890
        %1161 = vmatprep.subr.mxu0 0.0
        %1162 = vmatpush1.msra.mxu0 %v891
        %1163 = vmatprep.subr.mxu0 0.0
        %1164 = vmatpush1.msra.mxu0 %v892
        %1165 = vmatprep.subr.mxu0 0.0
        %1166 = vmatpush1.msra.mxu0 %v893
        %1167 = vmatprep.subr.mxu0 0.0
        %1168 = vmatpush1.msra.mxu0 %v894
        %1169 = vmatprep.subr.mxu0 0.0
        %1170 = vmatpush1.msra.mxu0 %v895
        %1171 = vmatprep.subr.mxu0 0.0
        %1172 = vmatpush1.msra.mxu0 %v896
        %1173 = vmatprep.subr.mxu0 0.0
        %1174 = vmatpush1.msra.mxu0 %v897
        %1175 = vmatprep.subr.mxu0 0.0
        %1176 = vmatpush1.msra.mxu0 %v898
        %1177 = vmatprep.subr.mxu0 0.0
        %1178 = vmatpush1.msra.mxu0 %v899
        %1179 = vmatprep.subr.mxu0 0.0
        %1180 = vmatpush1.msra.mxu0 %v900
        %1181 = vmatprep.subr.mxu0 0.0
        %1182 = vmatpush1.msra.mxu0 %v901
        %1183 = vmatprep.subr.mxu0 0.0
        %1184 = vmatpush1.msra.mxu0 %v902
        %1185 = vmatprep.subr.mxu0 0.0
        %1186 = vmatpush1.msra.mxu0 %v903
        %1187 = vmatprep.subr.mxu0 0.0
        %1188 = vmatpush1.msra.mxu0 0.0
        %1189 = vmatprep.subr.mxu0 0.0
        %1190 = vmatpush1.msra.mxu0 0.0
        %1191 = vmatprep.subr.mxu0 0.0
        %1192 = vmatpush1.msra.mxu0 0.0
        %1193 = vmatprep.subr.mxu0 0.0
        %1194 = vmatpush1.msra.mxu0 0.0
        %1195 = vmatprep.subr.mxu0 0.0
        %1196 = vmatpush1.msra.mxu0 0.0
        %1197 = vmatprep.subr.mxu0 0.0
        %1198 = vmatpush1.msra.mxu0 0.0
        %1199 = vmatprep.subr.mxu0 0.0
        %1200 = vmatpush1.msra.mxu0 0.0
        %1201 = vmatprep.subr.mxu0 0.0
        %1202 = vmatpush1.msra.mxu0 0.0
        %1203 = vmatprep.subr.mxu0 0.0
        %1204 = vmatpush1.msra.mxu0 0.0
        %1205 = vmatprep.subr.mxu0 0.0
        %1206 = vmatpush1.msra.mxu0 0.0
        %1207 = vmatprep.subr.mxu0 0.0
        %1208 = vmatpush1.msra.mxu0 0.0
        %1209 = vmatprep.subr.mxu0 0.0
        %1210 = vmatpush1.msra.mxu0 0.0
        %1211 = vmatprep.subr.mxu0 0.0
        %1212 = vmatpush1.msra.mxu0 0.0
        %1213 = vmatprep.subr.mxu0 0.0
        %1214 = vmatpush1.msra.mxu0 0.0
        %1215 = vmatprep.subr.mxu0 0.0
        %1216 = vmatpush1.msra.mxu0 0.0
        %1217 = vmatprep.subr.mxu0 0.0
        %1218 = vmatpush1.msra.mxu0 0.0
        %1219 = vmatprep.mubr.f32.mxu0 0.0
        %1220 = vmatmul.mubr.f32.gmra.mrb[0].mxu0 %v846
        %v1221 = vpop.f32.mrb[0].mxu0
        %v1222 = vadd.f32 %v1147, %v1221
        %v1223 = vpop.f32.mrb[0].mxu0
        %1224 = vmatprep.mubr.f32.mxu0 0.0
        %1225 = vmatmul.mubr.f32.gmra.mrb[0].mxu0 %v847
        %v1226 = vpop.f32.mrb[0].mxu0
        %v1227 = vadd.f32 %v1152, %v1226
        %v1228 = vpop.f32.mrb[0].mxu0
        %1229 = vdwg.mxu0
        %v1231 = vlaneseq
        %v1232 = vshrl.u32 %v1231, 7
        %v1233 = vsub.s32 0, %v1232
        %v1234 = vrot.slane %v920, %v1233
        %v1236 = vadd.f32 %v1222, %v1234
        %v1237 = vadd.f32 %v1227, %v1234
        %v1238 = vxor.u32 %v1236, 2147483648
        %v1239 = vxor.u32 %v1237, 2147483648
        %v1240 = vmul.f32 %v1238, 1.442695
        %v1241 = vpow.pop %v1240
        %v1242 = vmul.f32 %v1239, 1.442695
        %v1243 = vpow.pop %v1242
        %v1244 = vadd.f32 %v1241, 1.0
        %v1245 = vadd.f32 %v1243, 1.0
        %v1246 = vrcp.pop %v1244
        %v1247 = vmul.f32 1.0, %v1246
        %v1248 = vrcp.pop %v1245
        %v1249 = vmul.f32 1.0, %v1248
        %v1250 = vmul.f32 %v1236, %v1247
        %v1251 = vmul.f32 %v1237, %v1249
        %v1253 = vlaneseq
        %v1254 = vshrl.u32 %v1253, 7
        %v1255 = vsub.s32 0, %v1254
        %v1256 = vrot.slane %v937, %v1255
        %1258 = vmatprep.subr.mxu0 0.0
        %1259 = vmatpush1.msra.mxu0 %v921
        %1260 = vmatprep.subr.mxu0 0.0
        %1261 = vmatpush1.msra.mxu0 %v922
        %1262 = vmatprep.subr.mxu0 0.0
        %1263 = vmatpush1.msra.mxu0 %v923
        %1264 = vmatprep.subr.mxu0 0.0
        %1265 = vmatpush1.msra.mxu0 %v924
        %1266 = vmatprep.subr.mxu0 0.0
        %1267 = vmatpush1.msra.mxu0 %v925
        %1268 = vmatprep.subr.mxu0 0.0
        %1269 = vmatpush1.msra.mxu0 %v926
        %1270 = vmatprep.subr.mxu0 0.0
        %1271 = vmatpush1.msra.mxu0 %v927
        %1272 = vmatprep.subr.mxu0 0.0
        %1273 = vmatpush1.msra.mxu0 %v928
        %1274 = vmatprep.subr.mxu0 0.0
        %1275 = vmatpush1.msra.mxu0 %v929
        %1276 = vmatprep.subr.mxu0 0.0
        %1277 = vmatpush1.msra.mxu0 %v930
        %1278 = vmatprep.subr.mxu0 0.0
        %1279 = vmatpush1.msra.mxu0 %v931
        %1280 = vmatprep.subr.mxu0 0.0
        %1281 = vmatpush1.msra.mxu0 %v932
        %1282 = vmatprep.subr.mxu0 0.0
        %1283 = vmatpush1.msra.mxu0 %v933
        %1284 = vmatprep.subr.mxu0 0.0
        %1285 = vmatpush1.msra.mxu0 %v934
        %1286 = vmatprep.subr.mxu0 0.0
        %1287 = vmatpush1.msra.mxu0 %v935
        %1288 = vmatprep.subr.mxu0 0.0
        %1289 = vmatpush1.msra.mxu0 %v936
        %1290 = vmatprep.subr.mxu0 0.0
        %1291 = vmatpush1.msra.mxu0 0.0
        %1292 = vmatprep.subr.mxu0 0.0
        %1293 = vmatpush1.msra.mxu0 0.0
        %1294 = vmatprep.subr.mxu0 0.0
        %1295 = vmatpush1.msra.mxu0 0.0
        %1296 = vmatprep.subr.mxu0 0.0
        %1297 = vmatpush1.msra.mxu0 0.0
        %1298 = vmatprep.subr.mxu0 0.0
        %1299 = vmatpush1.msra.mxu0 0.0
        %1300 = vmatprep.subr.mxu0 0.0
        %1301 = vmatpush1.msra.mxu0 0.0
        %1302 = vmatprep.subr.mxu0 0.0
        %1303 = vmatpush1.msra.mxu0 0.0
        %1304 = vmatprep.subr.mxu0 0.0
        %1305 = vmatpush1.msra.mxu0 0.0
        %1306 = vmatprep.subr.mxu0 0.0
        %1307 = vmatpush1.msra.mxu0 0.0
        %1308 = vmatprep.subr.mxu0 0.0
        %1309 = vmatpush1.msra.mxu0 0.0
        %1310 = vmatprep.subr.mxu0 0.0
        %1311 = vmatpush1.msra.mxu0 0.0
        %1312 = vmatprep.subr.mxu0 0.0
        %1313 = vmatpush1.msra.mxu0 0.0
        %1314 = vmatprep.subr.mxu0 0.0
        %1315 = vmatpush1.msra.mxu0 0.0
        %1316 = vmatprep.subr.mxu0 0.0
        %1317 = vmatpush1.msra.mxu0 0.0
        %1318 = vmatprep.subr.mxu0 0.0
        %1319 = vmatpush1.msra.mxu0 0.0
        %1320 = vmatprep.subr.mxu0 0.0
        %1321 = vmatpush1.msra.mxu0 0.0
        %1322 = vmatprep.mubr.f32.mxu0 0.0
        %1323 = vmatmul.mubr.f32.gmra.mrb[0].mxu0 %v1250
        %v1324 = vpop.f32.mrb[0].mxu0
        %v1325 = vadd.f32 %v1256, %v1324
        %v1326 = vpop.f32.mrb[0].mxu0
        %1327 = vmatprep.mubr.f32.mxu0 0.0
        %1328 = vmatmul.mubr.f32.gmra.mrb[0].mxu0 %v1251
        %v1329 = vpop.f32.mrb[0].mxu0
        %v1330 = vadd.f32 %v1256, %v1329
        %v1331 = vpop.f32.mrb[0].mxu0
        %1332 = vdwg.mxu0
        %v1334 = vlaneseq
        %v1335 = vshrl.u32 %v1334, 7
        %v1336 = vsub.s32 0, %v1335
        %v1337 = vrot.slane %v954, %v1336
        %1339 = vmatprep.subr.mxu0 0.0
        %1340 = vmatpush1.msra.mxu0 %v938
        %1341 = vmatprep.subr.mxu0 0.0
        %1342 = vmatpush1.msra.mxu0 %v939
        %1343 = vmatprep.subr.mxu0 0.0
        %1344 = vmatpush1.msra.mxu0 %v940
        %1345 = vmatprep.subr.mxu0 0.0
        %1346 = vmatpush1.msra.mxu0 %v941
        %1347 = vmatprep.subr.mxu0 0.0
        %1348 = vmatpush1.msra.mxu0 %v942
        %1349 = vmatprep.subr.mxu0 0.0
        %1350 = vmatpush1.msra.mxu0 %v943
        %1351 = vmatprep.subr.mxu0 0.0
        %1352 = vmatpush1.msra.mxu0 %v944
        %1353 = vmatprep.subr.mxu0 0.0
        %1354 = vmatpush1.msra.mxu0 %v945
        %1355 = vmatprep.subr.mxu0 0.0
        %1356 = vmatpush1.msra.mxu0 %v946
        %1357 = vmatprep.subr.mxu0 0.0
        %1358 = vmatpush1.msra.mxu0 %v947
        %1359 = vmatprep.subr.mxu0 0.0
        %1360 = vmatpush1.msra.mxu0 %v948
        %1361 = vmatprep.subr.mxu0 0.0
        %1362 = vmatpush1.msra.mxu0 %v949
        %1363 = vmatprep.subr.mxu0 0.0
        %1364 = vmatpush1.msra.mxu0 %v950
        %1365 = vmatprep.subr.mxu0 0.0
        %1366 = vmatpush1.msra.mxu0 %v951
        %1367 = vmatprep.subr.mxu0 0.0
        %1368 = vmatpush1.msra.mxu0 %v952
        %1369 = vmatprep.subr.mxu0 0.0
        %1370 = vmatpush1.msra.mxu0 %v953
        %1371 = vmatprep.subr.mxu0 0.0
        %1372 = vmatpush1.msra.mxu0 0.0
        %1373 = vmatprep.subr.mxu0 0.0
        %1374 = vmatpush1.msra.mxu0 0.0
        %1375 = vmatprep.subr.mxu0 0.0
        %1376 = vmatpush1.msra.mxu0 0.0
        %1377 = vmatprep.subr.mxu0 0.0
        %1378 = vmatpush1.msra.mxu0 0.0
        %1379 = vmatprep.subr.mxu0 0.0
        %1380 = vmatpush1.msra.mxu0 0.0
        %1381 = vmatprep.subr.mxu0 0.0
        %1382 = vmatpush1.msra.mxu0 0.0
        %1383 = vmatprep.subr.mxu0 0.0
        %1384 = vmatpush1.msra.mxu0 0.0
        %1385 = vmatprep.subr.mxu0 0.0
        %1386 = vmatpush1.msra.mxu0 0.0
        %1387 = vmatprep.subr.mxu0 0.0
        %1388 = vmatpush1.msra.mxu0 0.0
        %1389 = vmatprep.subr.mxu0 0.0
        %1390 = vmatpush1.msra.mxu0 0.0
        %1391 = vmatprep.subr.mxu0 0.0
        %1392 = vmatpush1.msra.mxu0 0.0
        %1393 = vmatprep.subr.mxu0 0.0
        %1394 = vmatpush1.msra.mxu0 0.0
        %1395 = vmatprep.subr.mxu0 0.0
        %1396 = vmatpush1.msra.mxu0 0.0
        %1397 = vmatprep.subr.mxu0 0.0
        %1398 = vmatpush1.msra.mxu0 0.0
        %1399 = vmatprep.subr.mxu0 0.0
        %1400 = vmatpush1.msra.mxu0 0.0
        %1401 = vmatprep.subr.mxu0 0.0
        %1402 = vmatpush1.msra.mxu0 0.0
        %1403 = vmatprep.mubr.f32.mxu0 0.0
        %1404 = vmatmul.mubr.f32.gmra.mrb[0].mxu0 %v1250
        %v1405 = vpop.f32.mrb[0].mxu0
        %v1406 = vadd.f32 %v1337, %v1405
        %v1407 = vpop.f32.mrb[0].mxu0
        %1408 = vmatprep.mubr.f32.mxu0 0.0
        %1409 = vmatmul.mubr.f32.gmra.mrb[0].mxu0 %v1251
        %v1410 = vpop.f32.mrb[0].mxu0
        %v1411 = vadd.f32 %v1337, %v1410
        %v1412 = vpop.f32.mrb[0].mxu0
        %1413 = vdwg.mxu0
        %v1414 = vxor.u32 %v1325, 2147483648
        %v1415 = vxor.u32 %v1330, 2147483648
        %v1416 = vmul.f32 %v1414, 1.442695
        %v1417 = vpow.pop %v1416
        %v1418 = vmul.f32 %v1415, 1.442695
        %v1419 = vpow.pop %v1418
        %v1420 = vadd.f32 %v1417, 1.0
        %v1421 = vadd.f32 %v1419, 1.0
        %v1422 = vrcp.pop %v1420
        %v1423 = vmul.f32 1.0, %v1422
        %v1424 = vrcp.pop %v1421
        %v1425 = vmul.f32 1.0, %v1424
        %v1426 = vmul.f32 %v1325, %v1423
        %v1427 = vmul.f32 %v1330, %v1425
        %v1428 = vmul.f32 %v1406, %v1024
        %v1429 = vmul.f32 %v1411, %v1030
        %v1430 = vmul.f32 %v1406, %v1036
        %v1431 = vmul.f32 %v1411, %v1042
        %v1432 = vmul.f32 %v1406, %v1048
        %v1433 = vmul.f32 %v1411, %v1054
        %v1434 = vld [vmem:[#allocation14] sm:$0xff]
        %v1435 = vld [vmem:[#allocation14 + $0x8] sm:$0xff]
        %v1436 = vld [vmem:[#allocation14 + $0x10] sm:$0xff]
        %v1437 = vld [vmem:[#allocation14 + $0x18] sm:$0xff]
        %v1438 = vld [vmem:[#allocation14 + $0x20] sm:$0xff]
        %v1439 = vld [vmem:[#allocation14 + $0x28] sm:$0xff]
        %v1440 = vld [vmem:[#allocation14 + $0x30] sm:$0xff]
        %v1441 = vld [vmem:[#allocation14 + $0x38] sm:$0xff]
        %v1442 = vld [vmem:[#allocation14 + $0x40] sm:$0xff]
        %v1443 = vld [vmem:[#allocation14 + $0x48] sm:$0xff]
        %v1444 = vld [vmem:[#allocation14 + $0x50] sm:$0xff]
        %v1445 = vld [vmem:[#allocation14 + $0x58] sm:$0xff]
        %v1446 = vld [vmem:[#allocation14 + $0x60] sm:$0xff]
        %v1447 = vld [vmem:[#allocation14 + $0x68] sm:$0xff]
        %v1448 = vld [vmem:[#allocation14 + $0x70] sm:$0xff]
        %v1449 = vld [vmem:[#allocation14 + $0x78] sm:$0xff]
        %v1450 = vld [vmem:[#allocation14 + $0x80] sm:$0xff]
        %v1451 = vld [vmem:[#allocation14 + $0x88] sm:$0xff]
        %v1452 = vld [vmem:[#allocation14 + $0x90] sm:$0xff]
        %v1453 = vld [vmem:[#allocation14 + $0x98] sm:$0xff]
        %v1454 = vld [vmem:[#allocation14 + $0xa0] sm:$0xff]
        %v1455 = vld [vmem:[#allocation14 + $0xa8] sm:$0xff]
        %v1456 = vld [vmem:[#allocation14 + $0xb0] sm:$0xff]
        %v1457 = vld [vmem:[#allocation14 + $0xb8] sm:$0xff]
        %v1458 = vld [vmem:[#allocation14 + $0xc0] sm:$0xff]
        %v1459 = vld [vmem:[#allocation14 + $0xc8] sm:$0xff]
        %v1460 = vld [vmem:[#allocation14 + $0xd0] sm:$0xff]
        %v1461 = vld [vmem:[#allocation14 + $0xd8] sm:$0xff]
        %v1462 = vld [vmem:[#allocation14 + $0xe0] sm:$0xff]
        %v1463 = vld [vmem:[#allocation14 + $0xe8] sm:$0xff]
        %v1464 = vld [vmem:[#allocation14 + $0xf0] sm:$0xff]
        %v1465 = vld [vmem:[#allocation14 + $0xf8] sm:$0xff]
        %v1466 = vld [vmem:[#allocation16] sm:$0xff]
        %v1467 = vld [vmem:[#allocation16 + $0x8] sm:$0xff]
        %v1468 = vld [vmem:[#allocation16 + $0x10] sm:$0xff]
        %v1469 = vld [vmem:[#allocation16 + $0x18] sm:$0xff]
        %v1470 = vld [vmem:[#allocation16 + $0x20] sm:$0xff]
        %v1471 = vld [vmem:[#allocation16 + $0x28] sm:$0xff]
        %v1472 = vld [vmem:[#allocation16 + $0x30] sm:$0xff]
        %v1473 = vld [vmem:[#allocation16 + $0x38] sm:$0xff]
        %v1474 = vld [vmem:[#allocation16 + $0x40] sm:$0xff]
        %v1475 = vld [vmem:[#allocation16 + $0x48] sm:$0xff]
        %v1476 = vld [vmem:[#allocation16 + $0x50] sm:$0xff]
        %v1477 = vld [vmem:[#allocation16 + $0x58] sm:$0xff]
        %v1478 = vld [vmem:[#allocation16 + $0x60] sm:$0xff]
        %v1479 = vld [vmem:[#allocation16 + $0x68] sm:$0xff]
        %v1480 = vld [vmem:[#allocation16 + $0x70] sm:$0xff]
        %v1481 = vld [vmem:[#allocation16 + $0x78] sm:$0xff]
        %v1482 = vld [vmem:[#allocation17] sm:$0xff]
        %v1483 = vld [vmem:[#allocation17 + $0x8] sm:$0xff]
        %v1484 = vld [vmem:[#allocation17 + $0x10] sm:$0xff]
        %v1485 = vld [vmem:[#allocation17 + $0x18] sm:$0xff]
        %v1486 = vld [vmem:[#allocation17 + $0x20] sm:$0xff]
        %v1487 = vld [vmem:[#allocation17 + $0x28] sm:$0xff]
        %v1488 = vld [vmem:[#allocation17 + $0x30] sm:$0xff]
        %v1489 = vld [vmem:[#allocation17 + $0x38] sm:$0xff]
        %v1490 = vld [vmem:[#allocation17 + $0x40] sm:$0xff]
        %v1491 = vld [vmem:[#allocation17 + $0x48] sm:$0xff]
        %v1492 = vld [vmem:[#allocation17 + $0x50] sm:$0xff]
        %v1493 = vld [vmem:[#allocation17 + $0x58] sm:$0xff]
        %v1494 = vld [vmem:[#allocation17 + $0x60] sm:$0xff]
        %v1495 = vld [vmem:[#allocation17 + $0x68] sm:$0xff]
        %v1496 = vld [vmem:[#allocation17 + $0x70] sm:$0xff]
        %v1497 = vld [vmem:[#allocation17 + $0x78] sm:$0xff]
        %v1498 = vld [vmem:[%s15] sm:$0x1]
        %v1499 = vld [vmem:[#allocation19] sm:$0xff]
        %v1500 = vld [vmem:[#allocation19 + $0x8] sm:$0xff]
        %v1501 = vld [vmem:[#allocation19 + $0x10] sm:$0xff]
        %v1502 = vld [vmem:[#allocation19 + $0x18] sm:$0xff]
        %v1503 = vld [vmem:[#allocation19 + $0x20] sm:$0xff]
        %v1504 = vld [vmem:[#allocation19 + $0x28] sm:$0xff]
        %v1505 = vld [vmem:[#allocation19 + $0x30] sm:$0xff]
        %v1506 = vld [vmem:[#allocation19 + $0x38] sm:$0xff]
        %v1507 = vld [vmem:[#allocation19 + $0x40] sm:$0xff]
        %v1508 = vld [vmem:[#allocation19 + $0x48] sm:$0xff]
        %v1509 = vld [vmem:[#allocation19 + $0x50] sm:$0xff]
        %v1510 = vld [vmem:[#allocation19 + $0x58] sm:$0xff]
        %v1511 = vld [vmem:[#allocation19 + $0x60] sm:$0xff]
        %v1512 = vld [vmem:[#allocation19 + $0x68] sm:$0xff]
        %v1513 = vld [vmem:[#allocation19 + $0x70] sm:$0xff]
        %v1514 = vld [vmem:[#allocation19 + $0x78] sm:$0xff]
        %v1515 = vld [vmem:[%s16] sm:$0x1]
        %v1516 = vld [vmem:[#allocation20] sm:$0xff]
        %v1517 = vld [vmem:[#allocation20 + $0x8] sm:$0xff]
        %v1518 = vld [vmem:[#allocation20 + $0x10] sm:$0xff]
        %v1519 = vld [vmem:[#allocation20 + $0x18] sm:$0xff]
        %v1520 = vld [vmem:[#allocation20 + $0x20] sm:$0xff]
        %v1521 = vld [vmem:[#allocation20 + $0x28] sm:$0xff]
        %v1522 = vld [vmem:[#allocation20 + $0x30] sm:$0xff]
        %v1523 = vld [vmem:[#allocation20 + $0x38] sm:$0xff]
        %v1524 = vld [vmem:[#allocation20 + $0x40] sm:$0xff]
        %v1525 = vld [vmem:[#allocation20 + $0x48] sm:$0xff]
        %v1526 = vld [vmem:[#allocation20 + $0x50] sm:$0xff]
        %v1527 = vld [vmem:[#allocation20 + $0x58] sm:$0xff]
        %v1528 = vld [vmem:[#allocation20 + $0x60] sm:$0xff]
        %v1529 = vld [vmem:[#allocation20 + $0x68] sm:$0xff]
        %v1530 = vld [vmem:[#allocation20 + $0x70] sm:$0xff]
        %v1531 = vld [vmem:[#allocation20 + $0x78] sm:$0xff]
        %v1532 = vld [vmem:[%s17] sm:$0x1]
        %1533 = vmatprep.subr.mxu0 %v1435
        %1534 = vmatpush1.msra.mxu0 %v1434
        %1535 = vmatprep.subr.mxu0 %v1437
        %1536 = vmatpush1.msra.mxu0 %v1436
        %1537 = vmatprep.subr.mxu0 %v1439
        %1538 = vmatpush1.msra.mxu0 %v1438
        %1539 = vmatprep.subr.mxu0 %v1441
        %1540 = vmatpush1.msra.mxu0 %v1440
        %1541 = vmatprep.subr.mxu0 %v1443
        %1542 = vmatpush1.msra.mxu0 %v1442
        %1543 = vmatprep.subr.mxu0 %v1445
        %1544 = vmatpush1.msra.mxu0 %v1444
        %1545 = vmatprep.subr.mxu0 %v1447
        %1546 = vmatpush1.msra.mxu0 %v1446
        %1547 = vmatprep.subr.mxu0 %v1449
        %1548 = vmatpush1.msra.mxu0 %v1448
        %1549 = vmatprep.subr.mxu0 %v1451
        %1550 = vmatpush1.msra.mxu0 %v1450
        %1551 = vmatprep.subr.mxu0 %v1453
        %1552 = vmatpush1.msra.mxu0 %v1452
        %1553 = vmatprep.subr.mxu0 %v1455
        %1554 = vmatpush1.msra.mxu0 %v1454
        %1555 = vmatprep.subr.mxu0 %v1457
        %1556 = vmatpush1.msra.mxu0 %v1456
        %1557 = vmatprep.subr.mxu0 %v1459
        %1558 = vmatpush1.msra.mxu0 %v1458
        %1559 = vmatprep.subr.mxu0 %v1461
        %1560 = vmatpush1.msra.mxu0 %v1460
        %1561 = vmatprep.subr.mxu0 %v1463
        %1562 = vmatpush1.msra.mxu0 %v1462
        %1563 = vmatprep.subr.mxu0 %v1465
        %1564 = vmatpush1.msra.mxu0 %v1464
        %1565 = vmatprep.subr.mxu0 0.0
        %1566 = vmatpush1.msra.mxu0 0.0
        %1567 = vmatprep.subr.mxu0 0.0
        %1568 = vmatpush1.msra.mxu0 0.0
        %1569 = vmatprep.subr.mxu0 0.0
        %1570 = vmatpush1.msra.mxu0 0.0
        %1571 = vmatprep.subr.mxu0 0.0
        %1572 = vmatpush1.msra.mxu0 0.0
        %1573 = vmatprep.subr.mxu0 0.0
        %1574 = vmatpush1.msra.mxu0 0.0
        %1575 = vmatprep.subr.mxu0 0.0
        %1576 = vmatpush1.msra.mxu0 0.0
        %1577 = vmatprep.subr.mxu0 0.0
        %1578 = vmatpush1.msra.mxu0 0.0
        %1579 = vmatprep.subr.mxu0 0.0
        %1580 = vmatpush1.msra.mxu0 0.0
        %1581 = vmatprep.subr.mxu0 0.0
        %1582 = vmatpush1.msra.mxu0 0.0
        %1583 = vmatprep.subr.mxu0 0.0
        %1584 = vmatpush1.msra.mxu0 0.0
        %1585 = vmatprep.subr.mxu0 0.0
        %1586 = vmatpush1.msra.mxu0 0.0
        %1587 = vmatprep.subr.mxu0 0.0
        %1588 = vmatpush1.msra.mxu0 0.0
        %1589 = vmatprep.subr.mxu0 0.0
        %1590 = vmatpush1.msra.mxu0 0.0
        %1591 = vmatprep.subr.mxu0 0.0
        %1592 = vmatpush1.msra.mxu0 0.0
        %1593 = vmatprep.subr.mxu0 0.0
        %1594 = vmatpush1.msra.mxu0 0.0
        %1595 = vmatprep.subr.mxu0 0.0
        %1596 = vmatpush1.msra.mxu0 0.0
        %1597 = vmatprep.mubr.f32.mxu0 0.0
        %1598 = vmatmul.mubr.f32.gmra.mrb[0].mxu0 %v1428
        %v1599 = vpop.f32.mrb[0].mxu0
        %v1600 = vadd.f32 0.0, %v1599
        %v1601 = vpop.f32.mrb[0].mxu0
        %v1602 = vadd.f32 0.0, %v1601
        %1603 = vmatprep.mubr.f32.mxu0 0.0
        %1604 = vmatmul.mubr.f32.gmra.mrb[0].mxu0 %v1429
        %v1605 = vpop.f32.mrb[0].mxu0
        %v1606 = vadd.f32 0.0, %v1605
        %v1607 = vpop.f32.mrb[0].mxu0
        %v1608 = vadd.f32 0.0, %v1607
        %1609 = vmatprep.mubr.f32.mxu0 0.0
        %1610 = vmatmul.mubr.f32.gmra.mrb[0].mxu0 %v1430
        %v1611 = vpop.f32.mrb[0].mxu0
        %v1612 = vadd.f32 0.0, %v1611
        %v1613 = vpop.f32.mrb[0].mxu0
        %v1614 = vadd.f32 0.0, %v1613
        %1615 = vmatprep.mubr.f32.mxu0 0.0
        %1616 = vmatmul.mubr.f32.gmra.mrb[0].mxu0 %v1431
        %v1617 = vpop.f32.mrb[0].mxu0
        %v1618 = vadd.f32 0.0, %v1617
        %v1619 = vpop.f32.mrb[0].mxu0
        %v1620 = vadd.f32 0.0, %v1619
        %1621 = vmatprep.mubr.f32.mxu0 0.0
        %1622 = vmatmul.mubr.f32.gmra.mrb[0].mxu0 %v1432
        %v1623 = vpop.f32.mrb[0].mxu0
        %v1624 = vadd.f32 0.0, %v1623
        %v1625 = vpop.f32.mrb[0].mxu0
        %v1626 = vadd.f32 0.0, %v1625
        %1627 = vmatprep.mubr.f32.mxu0 0.0
        %1628 = vmatmul.mubr.f32.gmra.mrb[0].mxu0 %v1433
        %v1629 = vpop.f32.mrb[0].mxu0
        %v1630 = vadd.f32 0.0, %v1629
        %v1631 = vpop.f32.mrb[0].mxu0
        %v1632 = vadd.f32 0.0, %v1631
        %1633 = vdwg.mxu0
        %v1634 = vmul.f32 %v1600, %v1600
        %v1635 = vmul.f32 %v1606, %v1606
        %v1636 = vmul.f32 %v1612, %v1612
        %v1637 = vmul.f32 %v1618, %v1618
        %v1638 = vmul.f32 %v1624, %v1624
        %v1639 = vmul.f32 %v1630, %v1630
        %v1640 = vadd.f32 %v1634, %v1636
        %v1641 = vadd.f32 %v1635, %v1637
        %v1642 = vadd.f32 %v1640, %v1638
        %v1643 = vadd.f32 %v1641, %v1639
        %v1644 = vrsqrt.pop %v1642
        %v1645 = vmul.f32 %v1642, %v1644
        %vm1646 = vcmp.eq.f32.partialorder %v1642, inf
        %v1647 = vsel %vm1646, %v1642, %v1645
        %vm1648 = vcmp.eq.f32.partialorder %v1642, 0.0
        %v1649 = vand.u32 %v1642, 2147483648
        %v1650 = vsel %vm1648, %v1649, %v1647
        %v1651 = vrsqrt.pop %v1643
        %v1652 = vmul.f32 %v1643, %v1651
        %vm1653 = vcmp.eq.f32.partialorder %v1643, inf
        %v1654 = vsel %vm1653, %v1643, %v1652
        %vm1655 = vcmp.eq.f32.partialorder %v1643, 0.0
        %v1656 = vand.u32 %v1643, 2147483648
        %v1657 = vsel %vm1655, %v1656, %v1654
        %1658 = vmatprep.subr.mxu0 0.0
        %1659 = vmatpush1.msra.mxu0 %v1482
        %1660 = vmatprep.subr.mxu0 0.0
        %1661 = vmatpush1.msra.mxu0 %v1483
        %1662 = vmatprep.subr.mxu0 0.0
        %1663 = vmatpush1.msra.mxu0 %v1484
        %1664 = vmatprep.subr.mxu0 0.0
        %1665 = vmatpush1.msra.mxu0 %v1485
        %1666 = vmatprep.subr.mxu0 0.0
        %1667 = vmatpush1.msra.mxu0 %v1486
        %1668 = vmatprep.subr.mxu0 0.0
        %1669 = vmatpush1.msra.mxu0 %v1487
        %1670 = vmatprep.subr.mxu0 0.0
        %1671 = vmatpush1.msra.mxu0 %v1488
        %1672 = vmatprep.subr.mxu0 0.0
        %1673 = vmatpush1.msra.mxu0 %v1489
        %1674 = vmatprep.subr.mxu0 0.0
        %1675 = vmatpush1.msra.mxu0 %v1490
        %1676 = vmatprep.subr.mxu0 0.0
        %1677 = vmatpush1.msra.mxu0 %v1491
        %1678 = vmatprep.subr.mxu0 0.0
        %1679 = vmatpush1.msra.mxu0 %v1492
        %1680 = vmatprep.subr.mxu0 0.0
        %1681 = vmatpush1.msra.mxu0 %v1493
        %1682 = vmatprep.subr.mxu0 0.0
        %1683 = vmatpush1.msra.mxu0 %v1494
        %1684 = vmatprep.subr.mxu0 0.0
        %1685 = vmatpush1.msra.mxu0 %v1495
        %1686 = vmatprep.subr.mxu0 0.0
        %1687 = vmatpush1.msra.mxu0 %v1496
        %1688 = vmatprep.subr.mxu0 0.0
        %1689 = vmatpush1.msra.mxu0 %v1497
        %1690 = vmatprep.subr.mxu0 0.0
        %1691 = vmatpush1.msra.mxu0 0.0
        %1692 = vmatprep.subr.mxu0 0.0
        %1693 = vmatpush1.msra.mxu0 0.0
        %1694 = vmatprep.subr.mxu0 0.0
        %1695 = vmatpush1.msra.mxu0 0.0
        %1696 = vmatprep.subr.mxu0 0.0
        %1697 = vmatpush1.msra.mxu0 0.0
        %1698 = vmatprep.subr.mxu0 0.0
        %1699 = vmatpush1.msra.mxu0 0.0
        %1700 = vmatprep.subr.mxu0 0.0
        %1701 = vmatpush1.msra.mxu0 0.0
        %1702 = vmatprep.subr.mxu0 0.0
        %1703 = vmatpush1.msra.mxu0 0.0
        %1704 = vmatprep.subr.mxu0 0.0
        %1705 = vmatpush1.msra.mxu0 0.0
        %1706 = vmatprep.subr.mxu0 0.0
        %1707 = vmatpush1.msra.mxu0 0.0
        %1708 = vmatprep.subr.mxu0 0.0
        %1709 = vmatpush1.msra.mxu0 0.0
        %1710 = vmatprep.subr.mxu0 0.0
        %1711 = vmatpush1.msra.mxu0 0.0
        %1712 = vmatprep.subr.mxu0 0.0
        %1713 = vmatpush1.msra.mxu0 0.0
        %1714 = vmatprep.subr.mxu0 0.0
        %1715 = vmatpush1.msra.mxu0 0.0
        %1716 = vmatprep.subr.mxu0 0.0
        %1717 = vmatpush1.msra.mxu0 0.0
        %1718 = vmatprep.subr.mxu0 0.0
        %1719 = vmatpush1.msra.mxu0 0.0
        %1720 = vmatprep.subr.mxu0 0.0
        %1721 = vmatpush1.msra.mxu0 0.0
        %1722 = vmatprep.mubr.f32.mxu0 0.0
        %1723 = vmatmul.mubr.f32.gmra.mrb[0].mxu0 %v1650
        %v1724 = vpop.f32.mrb[0].mxu0
        %v1725 = vadd.f32 0.0, %v1724
        %v1726 = vpop.f32.mrb[0].mxu0
        %1727 = vmatprep.mubr.f32.mxu0 0.0
        %1728 = vmatmul.mubr.f32.gmra.mrb[0].mxu0 %v1657
        %v1729 = vpop.f32.mrb[0].mxu0
        %v1730 = vadd.f32 0.0, %v1729
        %v1731 = vpop.f32.mrb[0].mxu0
        %1732 = vdwg.mxu0
        %1733 = vmatprep.subr.mxu0 0.0
        %1734 = vmatpush1.msra.mxu0 %v1466
        %1735 = vmatprep.subr.mxu0 0.0
        %1736 = vmatpush1.msra.mxu0 %v1467
        %1737 = vmatprep.subr.mxu0 0.0
        %1738 = vmatpush1.msra.mxu0 %v1468
        %1739 = vmatprep.subr.mxu0 0.0
        %1740 = vmatpush1.msra.mxu0 %v1469
        %1741 = vmatprep.subr.mxu0 0.0
        %1742 = vmatpush1.msra.mxu0 %v1470
        %1743 = vmatprep.subr.mxu0 0.0
        %1744 = vmatpush1.msra.mxu0 %v1471
        %1745 = vmatprep.subr.mxu0 0.0
        %1746 = vmatpush1.msra.mxu0 %v1472
        %1747 = vmatprep.subr.mxu0 0.0
        %1748 = vmatpush1.msra.mxu0 %v1473
        %1749 = vmatprep.subr.mxu0 0.0
        %1750 = vmatpush1.msra.mxu0 %v1474
        %1751 = vmatprep.subr.mxu0 0.0
        %1752 = vmatpush1.msra.mxu0 %v1475
        %1753 = vmatprep.subr.mxu0 0.0
        %1754 = vmatpush1.msra.mxu0 %v1476
        %1755 = vmatprep.subr.mxu0 0.0
        %1756 = vmatpush1.msra.mxu0 %v1477
        %1757 = vmatprep.subr.mxu0 0.0
        %1758 = vmatpush1.msra.mxu0 %v1478
        %1759 = vmatprep.subr.mxu0 0.0
        %1760 = vmatpush1.msra.mxu0 %v1479
        %1761 = vmatprep.subr.mxu0 0.0
        %1762 = vmatpush1.msra.mxu0 %v1480
        %1763 = vmatprep.subr.mxu0 0.0
        %1764 = vmatpush1.msra.mxu0 %v1481
        %1765 = vmatprep.subr.mxu0 0.0
        %1766 = vmatpush1.msra.mxu0 0.0
        %1767 = vmatprep.subr.mxu0 0.0
        %1768 = vmatpush1.msra.mxu0 0.0
        %1769 = vmatprep.subr.mxu0 0.0
        %1770 = vmatpush1.msra.mxu0 0.0
        %1771 = vmatprep.subr.mxu0 0.0
        %1772 = vmatpush1.msra.mxu0 0.0
        %1773 = vmatprep.subr.mxu0 0.0
        %1774 = vmatpush1.msra.mxu0 0.0
        %1775 = vmatprep.subr.mxu0 0.0
        %1776 = vmatpush1.msra.mxu0 0.0
        %1777 = vmatprep.subr.mxu0 0.0
        %1778 = vmatpush1.msra.mxu0 0.0
        %1779 = vmatprep.subr.mxu0 0.0
        %1780 = vmatpush1.msra.mxu0 0.0
        %1781 = vmatprep.subr.mxu0 0.0
        %1782 = vmatpush1.msra.mxu0 0.0
        %1783 = vmatprep.subr.mxu0 0.0
        %1784 = vmatpush1.msra.mxu0 0.0
        %1785 = vmatprep.subr.mxu0 0.0
        %1786 = vmatpush1.msra.mxu0 0.0
        %1787 = vmatprep.subr.mxu0 0.0
        %1788 = vmatpush1.msra.mxu0 0.0
        %1789 = vmatprep.subr.mxu0 0.0
        %1790 = vmatpush1.msra.mxu0 0.0
        %1791 = vmatprep.subr.mxu0 0.0
        %1792 = vmatpush1.msra.mxu0 0.0
        %1793 = vmatprep.subr.mxu0 0.0
        %1794 = vmatpush1.msra.mxu0 0.0
        %1795 = vmatprep.subr.mxu0 0.0
        %1796 = vmatpush1.msra.mxu0 0.0
        %1797 = vmatprep.mubr.f32.mxu0 0.0
        %1798 = vmatmul.mubr.f32.gmra.mrb[0].mxu0 %v1426
        %v1799 = vpop.f32.mrb[0].mxu0
        %v1800 = vadd.f32 %v1725, %v1799
        %v1801 = vpop.f32.mrb[0].mxu0
        %1802 = vmatprep.mubr.f32.mxu0 0.0
        %1803 = vmatmul.mubr.f32.gmra.mrb[0].mxu0 %v1427
        %v1804 = vpop.f32.mrb[0].mxu0
        %v1805 = vadd.f32 %v1730, %v1804
        %v1806 = vpop.f32.mrb[0].mxu0
        %1807 = vdwg.mxu0
        %v1809 = vlaneseq
        %v1810 = vshrl.u32 %v1809, 7
        %v1811 = vsub.s32 0, %v1810
        %v1812 = vrot.slane %v1498, %v1811
        %v1814 = vadd.f32 %v1800, %v1812
        %v1815 = vadd.f32 %v1805, %v1812
        %v1816 = vxor.u32 %v1814, 2147483648
        %v1817 = vxor.u32 %v1815, 2147483648
        %v1818 = vmul.f32 %v1816, 1.442695
        %v1819 = vpow.pop %v1818
        %v1820 = vmul.f32 %v1817, 1.442695
        %v1821 = vpow.pop %v1820
        %v1822 = vadd.f32 %v1819, 1.0
        %v1823 = vadd.f32 %v1821, 1.0
        %v1824 = vrcp.pop %v1822
        %v1825 = vmul.f32 1.0, %v1824
        %v1826 = vrcp.pop %v1823
        %v1827 = vmul.f32 1.0, %v1826
        %v1828 = vmul.f32 %v1814, %v1825
        %v1829 = vmul.f32 %v1815, %v1827
        %v1831 = vlaneseq
        %v1832 = vshrl.u32 %v1831, 7
        %v1833 = vsub.s32 0, %v1832
        %v1834 = vrot.slane %v1515, %v1833
        %1836 = vmatprep.subr.mxu0 0.0
        %1837 = vmatpush1.msra.mxu0 %v1499
        %1838 = vmatprep.subr.mxu0 0.0
        %1839 = vmatpush1.msra.mxu0 %v1500
        %1840 = vmatprep.subr.mxu0 0.0
        %1841 = vmatpush1.msra.mxu0 %v1501
        %1842 = vmatprep.subr.mxu0 0.0
        %1843 = vmatpush1.msra.mxu0 %v1502
        %1844 = vmatprep.subr.mxu0 0.0
        %1845 = vmatpush1.msra.mxu0 %v1503
        %1846 = vmatprep.subr.mxu0 0.0
        %1847 = vmatpush1.msra.mxu0 %v1504
        %1848 = vmatprep.subr.mxu0 0.0
        %1849 = vmatpush1.msra.mxu0 %v1505
        %1850 = vmatprep.subr.mxu0 0.0
        %1851 = vmatpush1.msra.mxu0 %v1506
        %1852 = vmatprep.subr.mxu0 0.0
        %1853 = vmatpush1.msra.mxu0 %v1507
        %1854 = vmatprep.subr.mxu0 0.0
        %1855 = vmatpush1.msra.mxu0 %v1508
        %1856 = vmatprep.subr.mxu0 0.0
        %1857 = vmatpush1.msra.mxu0 %v1509
        %1858 = vmatprep.subr.mxu0 0.0
        %1859 = vmatpush1.msra.mxu0 %v1510
        %1860 = vmatprep.subr.mxu0 0.0
        %1861 = vmatpush1.msra.mxu0 %v1511
        %1862 = vmatprep.subr.mxu0 0.0
        %1863 = vmatpush1.msra.mxu0 %v1512
        %1864 = vmatprep.subr.mxu0 0.0
        %1865 = vmatpush1.msra.mxu0 %v1513
        %1866 = vmatprep.subr.mxu0 0.0
        %1867 = vmatpush1.msra.mxu0 %v1514
        %1868 = vmatprep.subr.mxu0 0.0
        %1869 = vmatpush1.msra.mxu0 0.0
        %1870 = vmatprep.subr.mxu0 0.0
        %1871 = vmatpush1.msra.mxu0 0.0
        %1872 = vmatprep.subr.mxu0 0.0
        %1873 = vmatpush1.msra.mxu0 0.0
        %1874 = vmatprep.subr.mxu0 0.0
        %1875 = vmatpush1.msra.mxu0 0.0
        %1876 = vmatprep.subr.mxu0 0.0
        %1877 = vmatpush1.msra.mxu0 0.0
        %1878 = vmatprep.subr.mxu0 0.0
        %1879 = vmatpush1.msra.mxu0 0.0
        %1880 = vmatprep.subr.mxu0 0.0
        %1881 = vmatpush1.msra.mxu0 0.0
        %1882 = vmatprep.subr.mxu0 0.0
        %1883 = vmatpush1.msra.mxu0 0.0
        %1884 = vmatprep.subr.mxu0 0.0
        %1885 = vmatpush1.msra.mxu0 0.0
        %1886 = vmatprep.subr.mxu0 0.0
        %1887 = vmatpush1.msra.mxu0 0.0
        %1888 = vmatprep.subr.mxu0 0.0
        %1889 = vmatpush1.msra.mxu0 0.0
        %1890 = vmatprep.subr.mxu0 0.0
        %1891 = vmatpush1.msra.mxu0 0.0
        %1892 = vmatprep.subr.mxu0 0.0
        %1893 = vmatpush1.msra.mxu0 0.0
        %1894 = vmatprep.subr.mxu0 0.0
        %1895 = vmatpush1.msra.mxu0 0.0
        %1896 = vmatprep.subr.mxu0 0.0
        %1897 = vmatpush1.msra.mxu0 0.0
        %1898 = vmatprep.subr.mxu0 0.0
        %1899 = vmatpush1.msra.mxu0 0.0
        %1900 = vmatprep.mubr.f32.mxu0 0.0
        %1901 = vmatmul.mubr.f32.gmra.mrb[0].mxu0 %v1828
        %v1902 = vpop.f32.mrb[0].mxu0
        %v1903 = vadd.f32 %v1834, %v1902
        %v1904 = vpop.f32.mrb[0].mxu0
        %1905 = vmatprep.mubr.f32.mxu0 0.0
        %1906 = vmatmul.mubr.f32.gmra.mrb[0].mxu0 %v1829
        %v1907 = vpop.f32.mrb[0].mxu0
        %v1908 = vadd.f32 %v1834, %v1907
        %v1909 = vpop.f32.mrb[0].mxu0
        %1910 = vdwg.mxu0
        %v1912 = vlaneseq
        %v1913 = vshrl.u32 %v1912, 7
        %v1914 = vsub.s32 0, %v1913
        %v1915 = vrot.slane %v1532, %v1914
        %1917 = vmatprep.subr.mxu0 0.0
        %1918 = vmatpush1.msra.mxu0 %v1516
        %1919 = vmatprep.subr.mxu0 0.0
        %1920 = vmatpush1.msra.mxu0 %v1517
        %1921 = vmatprep.subr.mxu0 0.0
        %1922 = vmatpush1.msra.mxu0 %v1518
        %1923 = vmatprep.subr.mxu0 0.0
        %1924 = vmatpush1.msra.mxu0 %v1519
        %1925 = vmatprep.subr.mxu0 0.0
        %1926 = vmatpush1.msra.mxu0 %v1520
        %1927 = vmatprep.subr.mxu0 0.0
        %1928 = vmatpush1.msra.mxu0 %v1521
        %1929 = vmatprep.subr.mxu0 0.0
        %1930 = vmatpush1.msra.mxu0 %v1522
        %1931 = vmatprep.subr.mxu0 0.0
        %1932 = vmatpush1.msra.mxu0 %v1523
        %1933 = vmatprep.subr.mxu0 0.0
        %1934 = vmatpush1.msra.mxu0 %v1524
        %1935 = vmatprep.subr.mxu0 0.0
        %1936 = vmatpush1.msra.mxu0 %v1525
        %1937 = vmatprep.subr.mxu0 0.0
        %1938 = vmatpush1.msra.mxu0 %v1526
        %1939 = vmatprep.subr.mxu0 0.0
        %1940 = vmatpush1.msra.mxu0 %v1527
        %1941 = vmatprep.subr.mxu0 0.0
        %1942 = vmatpush1.msra.mxu0 %v1528
        %1943 = vmatprep.subr.mxu0 0.0
        %1944 = vmatpush1.msra.mxu0 %v1529
        %1945 = vmatprep.subr.mxu0 0.0
        %1946 = vmatpush1.msra.mxu0 %v1530
        %1947 = vmatprep.subr.mxu0 0.0
        %1948 = vmatpush1.msra.mxu0 %v1531
        %1949 = vmatprep.subr.mxu0 0.0
        %1950 = vmatpush1.msra.mxu0 0.0
        %1951 = vmatprep.subr.mxu0 0.0
        %1952 = vmatpush1.msra.mxu0 0.0
        %1953 = vmatprep.subr.mxu0 0.0
        %1954 = vmatpush1.msra.mxu0 0.0
        %1955 = vmatprep.subr.mxu0 0.0
        %1956 = vmatpush1.msra.mxu0 0.0
        %1957 = vmatprep.subr.mxu0 0.0
        %1958 = vmatpush1.msra.mxu0 0.0
        %1959 = vmatprep.subr.mxu0 0.0
        %1960 = vmatpush1.msra.mxu0 0.0
        %1961 = vmatprep.subr.mxu0 0.0
        %1962 = vmatpush1.msra.mxu0 0.0
        %1963 = vmatprep.subr.mxu0 0.0
        %1964 = vmatpush1.msra.mxu0 0.0
        %1965 = vmatprep.subr.mxu0 0.0
        %1966 = vmatpush1.msra.mxu0 0.0
        %1967 = vmatprep.subr.mxu0 0.0
        %1968 = vmatpush1.msra.mxu0 0.0
        %1969 = vmatprep.subr.mxu0 0.0
        %1970 = vmatpush1.msra.mxu0 0.0
        %1971 = vmatprep.subr.mxu0 0.0
        %1972 = vmatpush1.msra.mxu0 0.0
        %1973 = vmatprep.subr.mxu0 0.0
        %1974 = vmatpush1.msra.mxu0 0.0
        %1975 = vmatprep.subr.mxu0 0.0
        %1976 = vmatpush1.msra.mxu0 0.0
        %1977 = vmatprep.subr.mxu0 0.0
        %1978 = vmatpush1.msra.mxu0 0.0
        %1979 = vmatprep.subr.mxu0 0.0
        %1980 = vmatpush1.msra.mxu0 0.0
        %1981 = vmatprep.mubr.f32.mxu0 0.0
        %1982 = vmatmul.mubr.f32.gmra.mrb[0].mxu0 %v1828
        %v1983 = vpop.f32.mrb[0].mxu0
        %v1984 = vadd.f32 %v1915, %v1983
        %v1985 = vpop.f32.mrb[0].mxu0
        %1986 = vmatprep.mubr.f32.mxu0 0.0
        %1987 = vmatmul.mubr.f32.gmra.mrb[0].mxu0 %v1829
        %v1988 = vpop.f32.mrb[0].mxu0
        %v1989 = vadd.f32 %v1915, %v1988
        %v1990 = vpop.f32.mrb[0].mxu0
        %1991 = vdwg.mxu0
        %v1992 = vxor.u32 %v1903, 2147483648
        %v1993 = vxor.u32 %v1908, 2147483648
        %v1994 = vmul.f32 %v1992, 1.442695
        %v1995 = vpow.pop %v1994
        %v1996 = vmul.f32 %v1993, 1.442695
        %v1997 = vpow.pop %v1996
        %v1998 = vadd.f32 %v1995, 1.0
        %v1999 = vadd.f32 %v1997, 1.0
        %v2000 = vrcp.pop %v1998
        %v2001 = vmul.f32 1.0, %v2000
        %v2002 = vrcp.pop %v1999
        %v2003 = vmul.f32 1.0, %v2002
        %v2004 = vmul.f32 %v1903, %v2001
        %v2005 = vmul.f32 %v1908, %v2003
        %v2006 = vmul.f32 %v1984, %v1602
        %v2007 = vmul.f32 %v1989, %v1608
        %v2008 = vmul.f32 %v1984, %v1614
        %v2009 = vmul.f32 %v1989, %v1620
        %v2010 = vmul.f32 %v1984, %v1626
        %v2011 = vmul.f32 %v1989, %v1632
        %2012 = vst [vmem:[%s834] sm:$0xff] %v2004
        %2013 = vst [vmem:[%s834 + $0x8] sm:$0xff] %v2005
        %2014 = vst [vmem:[%s841] sm:$0xff] %v2006
        %2015 = vst [vmem:[%s841 + $0x8] sm:$0xff] %v2007
        %s2016 = scalar_lea.vmem %s841, 16 [#allocation23]
        %2017 = vst [vmem:[%s2016] sm:$0xff] %v2008
        %2018 = vst [vmem:[%s2016 + $0x8] sm:$0xff] %v2009
        %s2019 = scalar_lea.vmem %s841, 32 [#allocation23]
        %2020 = vst [vmem:[%s2019] sm:$0xff] %v2010
        %2021 = vst [vmem:[%s2019 + $0x8] sm:$0xff] %v2011
        %s2022 = sand.u32 %s444, 1
        %s2023 = scalar_lea.sflag [#allocation4], %s2022
        %s2024 = sand.u32 %s444, 1
        %s2025 = smul.addr %s2024, 16
        %s2026 = scalar_lea.vmem [#allocation22], %s2025
        %s2027 = sand.u32 %s470, 1
        %s2028 = scalar_lea.sflag [#allocation24], %s2027
        %s2029 = sand.u32 %s470, 1
        %s2030 = smul.addr %s2029, 48
        %s2031 = scalar_lea.vmem [#allocation23], %s2030
        // Predicated region
        $region141: #{tpu_custom_call.1} parent=91 // pred_check
          %p2032 = pneg %p454
        $region142: #{tpu_custom_call.1} parent=91 // pred_check_branch
          %2034 = sbr.rel (%p2032) target = $region144
        $region143: #{tpu_custom_call.1} parent=91 // pred_region
          %s2035 = smul.u32 2, %s48
          %s2037 = ssub.s32 256, 256
          %2038 = vsyncadd %s2023, %s2037
          %s2039 = smul.addr %s2035, 128
          %s2040 = scalar_lea.hbm %s18, %s2039
          %s2041 = sshll.u32 %s2026, 4
          %s2042 = int_to_ptr.vmem [resolvable:$true] %s2041
          %2047 = dma.vmem_to_hbm [thread:$0]  %s2042, 256, %s2040, %s2023, 128, 128, 8
        $region144: #{tpu_custom_call.1} parent=91 // pred_fallthru
          _
        // Predicated region
        $region145: #{tpu_custom_call.1} parent=91 // pred_check
          %p2048 = pneg %p480
        $region146: #{tpu_custom_call.1} parent=91 // pred_check_branch
          %2050 = sbr.rel (%p2048) target = $region148
        $region147: #{tpu_custom_call.1} parent=91 // pred_region
          #allocation28 [shape = 'u32[6]{0}', space=smem, size = 0x18, scoped, tag = 'DMA stride descriptor']
          %s2051 = smul.u32 2, %s48
          %s2053 = ssub.s32 768, 768
          %2054 = vsyncadd %s2028, %s2053
          %s2055 = smul.addr %s2051, 128
          %s2056 = scalar_lea.hbm %s19, %s2055
          %s2058 = sshll.u32 1, 14
          %s2059 = sxor.u32 4294967295, %s2058
          %s2062 = sshll.u32 7, 18
          %s2063 = sxor.u32 4294967295, %s2062
          %s2064 = sand.u32 0, %s2063
          %s2066 = sor.u32 %s2064, 0
          %s2068 = sshll.u32 3, 24
          %s2069 = sxor.u32 4294967295, %s2068
          %s2070 = sand.u32 %s2066, %s2069
          %s2072 = sor.u32 %s2070, 0
          %s2073 = sshll.u32 %s2031, 4
          %s2074 = int_to_ptr.vmem [resolvable:$true] %s2073
          %2080 = sst [smem:[#allocation28]] 256
          %s2081 = scalar_lea.smem [#allocation28], 1
          %2082 = sst [smem:[%s2081]] 768
          %s2083 = scalar_lea.smem [#allocation28], 2
          %2084 = sst [smem:[%s2083]] 2
          %s2085 = scalar_lea.smem [#allocation28], 3
          %2086 = sst [smem:[%s2085]] 128
          %s2087 = scalar_lea.smem [#allocation28], 4
          %2088 = sst [smem:[%s2087]] 128
          %s2089 = scalar_lea.smem [#allocation28], 5
          %2090 = sst [smem:[%s2089]] 8
          %2092 = dma.general %s2074, 768, %s2056, %s2028, [#allocation27], [#allocation28], %s2072, 0
        $region148: #{tpu_custom_call.1} parent=91 // pred_fallthru
          _
      $region92: #{tpu_custom_call.1} parent=5 // pred_fallthru
        _
      %p2093 = scmp.le.s32.totalorder 2, %s43
      // Predicated region
      $region149: #{tpu_custom_call.1} parent=5 // pred_check
        %p2094 = pneg %p2093
      $region150: #{tpu_custom_call.1} parent=5 // pred_check_branch
        %2096 = sbr.rel (%p2094) target = $region152
      $region151: #{tpu_custom_call.1} parent=5 // pred_region
        %s2097 = ssub.s32 %s43, 2
        // Predicated region
        $region153: #{tpu_custom_call.1} parent=151 // pred_check
          %p2098 = pneg %p460
        $region154: #{tpu_custom_call.1} parent=151 // pred_check_branch
          %2100 = sbr.rel (%p2098) target = $region156
        $region155: #{tpu_custom_call.1} parent=151 // pred_region
          %s2101 = sand.u32 %s445, 1
          %s2102 = scalar_lea.sflag [#allocation4], %s2101
          %s2103 = sand.u32 %s445, 1
          %s2104 = smul.addr %s2103, 16
          %s2105 = scalar_lea.vmem [#allocation22], %s2104
          %2106 = dma.done %s2102, 256
        $region156: #{tpu_custom_call.1} parent=151 // pred_fallthru
          _
        // Predicated region
        $region157: #{tpu_custom_call.1} parent=151 // pred_check
          %p2107 = pneg %p486
        $region158: #{tpu_custom_call.1} parent=151 // pred_check_branch
          %2109 = sbr.rel (%p2107) target = $region160
        $region159: #{tpu_custom_call.1} parent=151 // pred_region
          %s2110 = sand.u32 %s471, 1
          %s2111 = scalar_lea.sflag [#allocation24], %s2110
          %s2112 = sand.u32 %s471, 1
          %s2113 = smul.addr %s2112, 48
          %s2114 = scalar_lea.vmem [#allocation23], %s2113
          %2115 = dma.done %s2111, 768
        $region160: #{tpu_custom_call.1} parent=151 // pred_fallthru
          _
      $region152: #{tpu_custom_call.1} parent=5 // pred_fallthru
        _
    $region6: #{tpu_custom_call.1} parent=1 // loop_footer
      %s47 = sadd.s32 1, %s43
    $region7: #{tpu_custom_call.1} parent=1 // loop_footer_branch
      %42 = sbr.rel target = $region3
    $region8: #{tpu_custom_call.1} parent=1 // loop_exit
      _
    %2116 = vsyncpa [#allocation3], 1
    %s2117 = scalar_lea.sflag [#allocation3], 1
    %2118 = vsyncpa %s2117, 1
    %2119 = vsyncpa [#allocation6], 1
    %s2120 = scalar_lea.sflag [#allocation6], 1
    %2121 = vsyncpa %s2120, 1
    %2122 = vsyncpa [#allocation9], 1
    %2123 = vsyncpa [#allocation12], 1
    %2124 = vsyncpa [#allocation15], 1
    %2125 = vsyncpa [#allocation18], 1
    %2126 = vsyncpa [#allocation21], 1
    %2127 = vsyncpa [#allocation4], 1
    %s2128 = scalar_lea.sflag [#allocation4], 1
    %2129 = vsyncpa %s2128, 1
    %2130 = vsyncpa [#allocation24], 1
    %s2131 = scalar_lea.sflag [#allocation24], 1
    %2132 = vsyncpa %s2131, 1

</llo_original>
